<compile_context>
chip_gen: v7x
topology: tpu7x:2x2x1
jax: 0.10.0
libtpu: 0.0.40
codegen_flags: <defaults>
</compile_context>

<pallas_src>
import math

import numpy as np
import jax
import jax.numpy as jnp
from jax.experimental import pallas as pl
from jax.experimental.pallas import tpu as pltpu


# ---------------------------------------------------------------------------
# compile_comparisons (pure Python/NumPy glue, identical to the torch version)
# ---------------------------------------------------------------------------
def compile_comparisons(N: int):
    l1, l2, groups = [], [], []
    sqrt_N = int(math.sqrt(N))
    for i in range(N):
        groups.append([i * N + j for j in range(N)])
        groups.append([j * N + i for j in range(N)])
    for i in range(sqrt_N):
        for j in range(sqrt_N):
            box_group = []
            base = (i * N + j) * sqrt_N
            for x in range(sqrt_N):
                for y in range(sqrt_N):
                    box_group.append(base + x * N + y)
            groups.append(box_group)
    for i in range(N * N):
        xi, yi = i % N, i // N
        bxi, byi = xi // sqrt_N, yi // sqrt_N
        for j in range(i + 1, N * N):
            xj, yj = j % N, j // N
            bxj, byj = xj // sqrt_N, yj // sqrt_N
            if xi == xj or yi == yj or (bxi == bxj and byi == byj):
                l1.append(i)
                l2.append(j)
    return np.asarray(l1, np.int32), np.asarray(l2, np.int32), np.asarray(groups, np.int32)


def pick_weights_dtype():
    """bf16 weights on v6e/v7x (full-rate MXU, halves weight DMA); f32 elsewhere."""
    try:
        kind = jax.devices()[0].device_kind.lower()
    except Exception:
        return jnp.float32
    if "v6" in kind or "v7" in kind:
        return jnp.bfloat16
    return jnp.float32


# ---------------------------------------------------------------------------
# One-time parameter packing (host-side numpy).  Folds the d1/d2/groups
# gathers + the pair/group head stacking into ONE matmul plus a tiny
# elementwise second layer:
#   h   = relu( Pflat @ W1 + b1 )        Pflat: (B, N^3)   W1: (N^3, H*R_pad)
#   z_r = sum_h h[:, h*R_pad + r] * w2f[h*R_pad + r] + b2[r]
#   out = sigmoid(z)
# Column order is h-major (col = h*R_pad + r) so the second layer is a pure
# VPU multiply + H-way lane-block sum (no dense/zero-padded MXU matmul).
# R = Y + G rows (pair heads first, group heads after).  Padded lanes
# (r >= R) have zero w2f / b2, produce sigmoid(0)=0.5, and are sliced off.
# ---------------------------------------------------------------------------
def pack_visudo_params(params, d1, d2, groups, N, weights_dtype=jnp.float32):
    d1 = np.asarray(d1)
    d2 = np.asarray(d2)
    groups = np.asarray(groups)
    Y, G = d1.shape[0], groups.shape[0]
    R = Y + G
    R_pad = ((R + 127) // 128) * 128
    F = N * N * N                       # flattened P features: f = cell*N + digit

    y_in_w = np.asarray(params["y_in_w"], np.float32)    # (2N, H)
    y_in_b = np.asarray(params["y_in_b"], np.float32)    # (H,)
    y_out_w = np.asarray(params["y_out_w"], np.float32)  # (H, 1)
    y_out_b = np.asarray(params["y_out_b"], np.float32)  # (1,)
    g_in_w = np.asarray(params["g_in_w"], np.float32)    # (N*N, H)
    g_in_b = np.asarray(params["g_in_b"], np.float32)
    g_out_w = np.asarray(params["g_out_w"], np.float32)
    g_out_b = np.asarray(params["g_out_b"], np.float32)
    H = y_in_b.shape[0]

    # --- first layer: fold the gathers into the weights, h-major columns ----
    W1 = np.zeros((F, H, R_pad), np.float32)
    for y in range(Y):                      # pair rows: x = [P[d1[y]], P[d2[y]]]
        c1, c2 = int(d1[y]), int(d2[y])
        W1[c1 * N:(c1 + 1) * N, :, y] += y_in_w[:N, :]
        W1[c2 * N:(c2 + 1) * N, :, y] += y_in_w[N:, :]
    for g in range(G):                      # group rows: x = P[groups[g]].reshape(N*N)
        for k in range(N):
            c = int(groups[g, k])
            W1[c * N:(c + 1) * N, :, Y + g] += g_in_w[k * N:(k + 1) * N, :]

    b1 = np.zeros((H, R_pad), np.float32)
    b1[:, :Y] = y_in_b[:, None]
    b1[:, Y:R] = g_in_b[:, None]

    # --- second layer folded into a per-lane table + per-row bias -----------
    w2f = np.zeros((H, R_pad), np.float32)
    w2f[:, :Y] = y_out_w[:, 0:1]
    w2f[:, Y:R] = g_out_w[:, 0:1]
    b2 = np.zeros((1, R_pad), np.float32)
    b2[0, :Y] = y_out_b[0]
    b2[0, Y:R] = g_out_b[0]

    return dict(
        W1=jnp.asarray(W1.reshape(F, H * R_pad), dtype=weights_dtype),
        b1=jnp.asarray(b1.reshape(1, H * R_pad)),        # f32: post-dot math stays f32
        w2f=jnp.asarray(w2f.reshape(1, H * R_pad)),
        b2=jnp.asarray(b2),
        Y=Y, G=G, R=R, R_pad=R_pad, H=H, F=F,
    )


# ---------------------------------------------------------------------------
# Pallas kernel: both MLP heads fused; one MXU matmul + VPU second layer.
# ---------------------------------------------------------------------------
def _fused_heads_kernel(pflat_ref, w1_ref, b1_ref, w2f_ref, b2_ref, o_ref):
    # (TB, N^3) @ (N^3, H*R_pad): first layer of BOTH heads, gathers pre-folded.
    x = pflat_ref[...].astype(w1_ref.dtype)               # no-op for f32 weights
    h = jnp.dot(x, w1_ref[...], preferred_element_type=jnp.float32)
    h = jnp.maximum(h + b1_ref[...], 0.0)                 # ReLU + bias (f32, VPU)

    # second layer: elementwise multiply by the folded w2 table, then sum the
    # H lane-blocks (each block is one 128-lane tile) with a shallow tree.
    hw = h * w2f_ref[...]                                  # (TB, H*R_pad)
    r_pad = b2_ref.shape[-1]
    n_h = hw.shape[-1] // r_pad
    parts = [hw[:, i * r_pad:(i + 1) * r_pad] for i in range(n_h)]
    while len(parts) > 1:
        nxt = [parts[i] + parts[i + 1] for i in range(0, len(parts) - 1, 2)]
        if len(parts) % 2:
            nxt.append(parts[-1])
        parts = nxt
    z = parts[0] + b2_ref[...]                             # (TB, R_pad)

    # exact sigmoid (EUP exp + f32 divide); epilogue is nowhere near the
    # bottleneck, so no approximate reciprocal.
    o_ref[...] = 1.0 / (1.0 + jnp.exp(-z))


def visudo_distribution(P, packed, *, tile_b=256):
    """P: (B, N*N, N) probabilities -> dist (B, Y + G, 1)."""
    B = P.shape[0]
    F, R_pad = packed["F"], packed["R_pad"]
    pflat = P.reshape(B, F).astype(jnp.float32)            # contiguous reshape only

    # sublane-pad the batch (multiple of 8; multiple of tile_b for the grid)
    b_pad = max(8, ((B + 7) // 8) * 8)
    if b_pad > tile_b:
        b_pad = ((b_pad + tile_b - 1) // tile_b) * tile_b
        tb = tile_b
    else:
        tb = b_pad
    if b_pad != B:
        pflat = jnp.pad(pflat, ((0, b_pad - B), (0, 0)))
    grid = (b_pad // tb,)

    w1, b1, w2f, b2 = packed["W1"], packed["b1"], packed["w2f"], packed["b2"]
    hrp = w1.shape[1]
    bytes_accessed = (
        pflat.size * 4 + w1.size * w1.dtype.itemsize
        + b1.size * 4 + w2f.size * 4 + b2.size * 4 + b_pad * R_pad * 4
    )
    cost = pl.CostEstimate(
        flops=2 * b_pad * F * hrp + 3 * b_pad * hrp,
        transcendentals=b_pad * R_pad,
        bytes_accessed=int(bytes_accessed),
    )

    out = pl.pallas_call(
        _fused_heads_kernel,
        out_shape=jax.ShapeDtypeStruct((b_pad, R_pad), jnp.float32),
        grid=grid,
        in_specs=[
            pl.BlockSpec((tb, F), lambda i: (i, 0)),
            # constant block index -> weights stay VMEM-resident across grid steps
            pl.BlockSpec(w1.shape, lambda i: (0, 0)),
            pl.BlockSpec(b1.shape, lambda i: (0, 0)),
            pl.BlockSpec(w2f.shape, lambda i: (0, 0)),
            pl.BlockSpec(b2.shape, lambda i: (0, 0)),
        ],
        out_specs=pl.BlockSpec((tb, R_pad), lambda i: (i, 0)),
        compiler_params=pltpu.CompilerParams(dimension_semantics=("parallel",)),
        cost_estimate=cost,
    )(pflat, w1, b1, w2f, b2)

    return out[:B, :packed["R"]].reshape(B, packed["R"], 1)


# ---------------------------------------------------------------------------
# symbolic_function: deliberately plain XLA (a pallas_call launch costs more
# than these ~100 integer compares; layout is also vreg-pathological).
# ---------------------------------------------------------------------------
def symbolic_function(w, d1, d2, groups, N):
    """w: (B, N*N) int32 world -> (B, Y+G) int32 constraint truths ('group' enc)."""
    B = w.shape[0]
    G = groups.shape[0]
    pairs = (w[:, d1] != w[:, d2]).astype(jnp.int32)               # (B, Y)
    g = w[:, groups.reshape(-1)].reshape(B, G, N)                  # (B, G, N)
    truth = jnp.ones((B, G), jnp.int32)
    for i in range(N):
        for j in range(i + 1, N):
            truth = truth * (g[:, :, i] != g[:, :, j]).astype(jnp.int32)
    return jnp.concatenate([pairs, truth], axis=-1)


# ---------------------------------------------------------------------------
# Deterministic parameter init (PyTorch nn.Linear default: U(-1/sqrt(fan_in), ..))
# ---------------------------------------------------------------------------
def init_linear(key, fan_in, fan_out):
    bound = 1.0 / math.sqrt(fan_in)
    kw, kb = jax.random.split(key)
    W = jax.random.uniform(kw, (fan_in, fan_out), jnp.float32, -bound, bound)
    b = jax.random.uniform(kb, (fan_out,), jnp.float32, -bound, bound)
    return W, b


# ---------------------------------------------------------------------------
# Pure-JAX reference (unpacked params, original gather formulation)
# ---------------------------------------------------------------------------
def ref_distribution(P, params, d1, d2, groups, N):
    B = P.shape[0]
    G = groups.shape[0]
    p = jnp.concatenate([P[:, d1, :], P[:, d2, :]], axis=-1)
    z1 = jax.nn.relu(p @ params["y_in_w"] + params["y_in_b"])
    dist = jax.nn.sigmoid(z1 @ params["y_out_w"] + params["y_out_b"])
    pg = P[:, groups.reshape(-1), :].reshape(B, G, N * N)
    z2 = jax.nn.relu(pg @ params["g_in_w"] + params["g_in_b"])
    dist2 = jax.nn.sigmoid(z2 @ params["g_out_w"] + params["g_out_b"])
    return jnp.concatenate([dist, dist2], axis=1)


if __name__ == "__main__":
    N = 4                 # 4x4 sudoku (sqrt_N = 2)
    B = 2                 # batch
    HIDDEN = 32           # hidden_size
    d1_np, d2_np, groups_np = compile_comparisons(N)   # Y=56 pairs, G=12 groups
    d1 = jnp.asarray(d1_np)
    d2 = jnp.asarray(d2_np)
    groups = jnp.asarray(groups_np)

    key = jax.random.PRNGKey(0)
    k_p, k1, k2, k3, k4 = jax.random.split(key, 5)

    # P: per-cell digit probabilities, (B, N*N, N), rows sum to 1.
    logits = jax.random.normal(k_p, (B, N * N, N), jnp.float32)
    P = jax.nn.softmax(logits, axis=-1)

    y_in_w, y_in_b = init_linear(k1, 2 * N, HIDDEN)
    y_out_w, y_out_b = init_linear(k2, HIDDEN, 1)
    g_in_w, g_in_b = init_linear(k3, N * N, HIDDEN)
    g_out_w, g_out_b = init_linear(k4, HIDDEN, 1)
    params = dict(
        y_in_w=y_in_w, y_in_b=y_in_b, y_out_w=y_out_w, y_out_b=y_out_b,
        g_in_w=g_in_w, g_in_b=g_in_b, g_out_w=g_out_w, g_out_b=g_out_b,
    )

    # one-time host-side weight packing (folds gathers + both heads + layer 2)
    w_dtype = pick_weights_dtype()          # bf16 on v6e/v7x, f32 on v5e & others
    packed = pack_visudo_params(params, d1_np, d2_np, groups_np, N,
                                weights_dtype=w_dtype)

    # --- y-distribution (ViSudoIMShallow.distribution, group encoding) ---
    dist = visudo_distribution(P, packed)
    dist = jax.block_until_ready(dist)
    dist_ref = ref_distribution(P, params, d1, d2, groups, N)
    assert dist.shape == (B, d1_np.shape[0] + groups_np.shape[0], 1)
    tol = 2e-2 if w_dtype == jnp.bfloat16 else 1e-4
    np.testing.assert_allclose(np.asarray(dist), np.asarray(dist_ref),
                               rtol=tol, atol=tol)

    # --- symbolic_function on the MAP world (argmax of P) ---
    w_map = jnp.argmax(P, axis=-1).astype(jnp.int32)          # (B, N*N)
    constr = symbolic_function(w_map, d1, d2, groups, N)
    constr = jax.block_until_ready(constr)
    assert constr.shape == (B, d1_np.shape[0] + groups_np.shape[0])

    # sanity: a valid 4x4 sudoku satisfies all constraints; breaking one cell
    # violates at least one (mirrors ViSudoModel._test_constraints).
    valid = np.array([[0, 1, 2, 3,
                       2, 3, 0, 1,
                       1, 0, 3, 2,
                       3, 2, 1, 0]], np.int32)
    c_valid = symbolic_function(jnp.asarray(valid), d1, d2, groups, N)
    assert int(jnp.min(c_valid)) == 1
    broken = valid.copy()
    broken[0, 5] = 2
    c_broken = symbolic_function(jnp.asarray(broken), d1, d2, groups, N)
    assert int(jnp.min(c_broken)) == 0

    print("KERNEL_OK")
</pallas_src>

<mosaic_0001>
module attributes {stable_mosaic.version = 11 : i64} {
  func.func @_fused_heads_kernel(%arg0: i32, %arg1: memref<8x64xf32, #tpu.memory_space<vmem>>, %arg2: memref<64x4096xf32, #tpu.memory_space<vmem>>, %arg3: memref<1x4096xf32, #tpu.memory_space<vmem>>, %arg4: memref<1x4096xf32, #tpu.memory_space<vmem>>, %arg5: memref<1x128xf32, #tpu.memory_space<vmem>>, %arg6: memref<8x128xf32, #tpu.memory_space<vmem>>) attributes {dimension_semantics = [#tpu.dimension_semantics<parallel>], iteration_bounds = array<i64: 1>, scalar_prefetch = 0 : i64, scratch_operands = 0 : i64, tpu.core_type = #tpu.core_type<tc>, window_params = [{transform_indices = @transform_0, window_bounds = array<i64: 8, 64>}, {pipeline_mode = #tpu.pipeline_mode<synchronous>, transform_indices = @transform_1, window_bounds = array<i64: 64, 4096>}, {pipeline_mode = #tpu.pipeline_mode<synchronous>, transform_indices = @transform_2, window_bounds = array<i64: 1, 4096>}, {pipeline_mode = #tpu.pipeline_mode<synchronous>, transform_indices = @transform_3, window_bounds = array<i64: 1, 4096>}, {pipeline_mode = #tpu.pipeline_mode<synchronous>, transform_indices = @transform_4, window_bounds = array<i64: 1, 128>}, {transform_indices = @transform_5, window_bounds = array<i64: 8, 128>}]} {
    %c0 = arith.constant 0 : index
    %c0_0 = arith.constant 0 : index
    %0 = vector.load %arg1[%c0, %c0_0] : memref<8x64xf32, #tpu.memory_space<vmem>>, vector<8x64xf32>
    %c0_1 = arith.constant 0 : index
    %c0_2 = arith.constant 0 : index
    %1 = vector.load %arg2[%c0_1, %c0_2] : memref<64x4096xf32, #tpu.memory_space<vmem>>, vector<64x4096xf32>
    %cst = arith.constant dense<0.000000e+00> : vector<8x4096xf32>
    %2 = tpu.matmul %0, %1, %cst {dimension_numbers = #tpu.dot_dimension_numbers<[1], [0], [0], [1], [0, 0, 1, 1], [], []>} : vector<8x64xf32>, vector<64x4096xf32>, vector<8x4096xf32> -> vector<8x4096xf32>
    %c0_3 = arith.constant 0 : index
    %c0_4 = arith.constant 0 : index
    %3 = vector.load %arg3[%c0_3, %c0_4] : memref<1x4096xf32, #tpu.memory_space<vmem>>, vector<1x4096xf32>
    %4 = vector.broadcast %3 : vector<1x4096xf32> to vector<8x4096xf32>
    %5 = arith.addf %2, %4 : vector<8x4096xf32>
    %cst_5 = arith.constant 0.000000e+00 : f32
    %6 = vector.broadcast %cst_5 : f32 to vector<8x4096xf32>
    %7 = arith.maximumf %5, %6 : vector<8x4096xf32>
    %c0_6 = arith.constant 0 : index
    %c0_7 = arith.constant 0 : index
    %8 = vector.load %arg4[%c0_6, %c0_7] : memref<1x4096xf32, #tpu.memory_space<vmem>>, vector<1x4096xf32>
    %9 = vector.broadcast %8 : vector<1x4096xf32> to vector<8x4096xf32>
    %10 = arith.mulf %7, %9 : vector<8x4096xf32>
    %11 = vector.extract_strided_slice %10 {offsets = [0, 0], sizes = [8, 128], strides = [1, 1]} : vector<8x4096xf32> to vector<8x128xf32>
    %12 = vector.extract_strided_slice %10 {offsets = [0, 128], sizes = [8, 128], strides = [1, 1]} : vector<8x4096xf32> to vector<8x128xf32>
    %13 = vector.extract_strided_slice %10 {offsets = [0, 256], sizes = [8, 128], strides = [1, 1]} : vector<8x4096xf32> to vector<8x128xf32>
    %14 = vector.extract_strided_slice %10 {offsets = [0, 384], sizes = [8, 128], strides = [1, 1]} : vector<8x4096xf32> to vector<8x128xf32>
    %15 = vector.extract_strided_slice %10 {offsets = [0, 512], sizes = [8, 128], strides = [1, 1]} : vector<8x4096xf32> to vector<8x128xf32>
    %16 = vector.extract_strided_slice %10 {offsets = [0, 640], sizes = [8, 128], strides = [1, 1]} : vector<8x4096xf32> to vector<8x128xf32>
    %17 = vector.extract_strided_slice %10 {offsets = [0, 768], sizes = [8, 128], strides = [1, 1]} : vector<8x4096xf32> to vector<8x128xf32>
    %18 = vector.extract_strided_slice %10 {offsets = [0, 896], sizes = [8, 128], strides = [1, 1]} : vector<8x4096xf32> to vector<8x128xf32>
    %19 = vector.extract_strided_slice %10 {offsets = [0, 1024], sizes = [8, 128], strides = [1, 1]} : vector<8x4096xf32> to vector<8x128xf32>
    %20 = vector.extract_strided_slice %10 {offsets = [0, 1152], sizes = [8, 128], strides = [1, 1]} : vector<8x4096xf32> to vector<8x128xf32>
    %21 = vector.extract_strided_slice %10 {offsets = [0, 1280], sizes = [8, 128], strides = [1, 1]} : vector<8x4096xf32> to vector<8x128xf32>
    %22 = vector.extract_strided_slice %10 {offsets = [0, 1408], sizes = [8, 128], strides = [1, 1]} : vector<8x4096xf32> to vector<8x128xf32>
    %23 = vector.extract_strided_slice %10 {offsets = [0, 1536], sizes = [8, 128], strides = [1, 1]} : vector<8x4096xf32> to vector<8x128xf32>
    %24 = vector.extract_strided_slice %10 {offsets = [0, 1664], sizes = [8, 128], strides = [1, 1]} : vector<8x4096xf32> to vector<8x128xf32>
    %25 = vector.extract_strided_slice %10 {offsets = [0, 1792], sizes = [8, 128], strides = [1, 1]} : vector<8x4096xf32> to vector<8x128xf32>
    %26 = vector.extract_strided_slice %10 {offsets = [0, 1920], sizes = [8, 128], strides = [1, 1]} : vector<8x4096xf32> to vector<8x128xf32>
    %27 = vector.extract_strided_slice %10 {offsets = [0, 2048], sizes = [8, 128], strides = [1, 1]} : vector<8x4096xf32> to vector<8x128xf32>
    %28 = vector.extract_strided_slice %10 {offsets = [0, 2176], sizes = [8, 128], strides = [1, 1]} : vector<8x4096xf32> to vector<8x128xf32>
    %29 = vector.extract_strided_slice %10 {offsets = [0, 2304], sizes = [8, 128], strides = [1, 1]} : vector<8x4096xf32> to vector<8x128xf32>
    %30 = vector.extract_strided_slice %10 {offsets = [0, 2432], sizes = [8, 128], strides = [1, 1]} : vector<8x4096xf32> to vector<8x128xf32>
    %31 = vector.extract_strided_slice %10 {offsets = [0, 2560], sizes = [8, 128], strides = [1, 1]} : vector<8x4096xf32> to vector<8x128xf32>
    %32 = vector.extract_strided_slice %10 {offsets = [0, 2688], sizes = [8, 128], strides = [1, 1]} : vector<8x4096xf32> to vector<8x128xf32>
    %33 = vector.extract_strided_slice %10 {offsets = [0, 2816], sizes = [8, 128], strides = [1, 1]} : vector<8x4096xf32> to vector<8x128xf32>
    %34 = vector.extract_strided_slice %10 {offsets = [0, 2944], sizes = [8, 128], strides = [1, 1]} : vector<8x4096xf32> to vector<8x128xf32>
    %35 = vector.extract_strided_slice %10 {offsets = [0, 3072], sizes = [8, 128], strides = [1, 1]} : vector<8x4096xf32> to vector<8x128xf32>
    %36 = vector.extract_strided_slice %10 {offsets = [0, 3200], sizes = [8, 128], strides = [1, 1]} : vector<8x4096xf32> to vector<8x128xf32>
    %37 = vector.extract_strided_slice %10 {offsets = [0, 3328], sizes = [8, 128], strides = [1, 1]} : vector<8x4096xf32> to vector<8x128xf32>
    %38 = vector.extract_strided_slice %10 {offsets = [0, 3456], sizes = [8, 128], strides = [1, 1]} : vector<8x4096xf32> to vector<8x128xf32>
    %39 = vector.extract_strided_slice %10 {offsets = [0, 3584], sizes = [8, 128], strides = [1, 1]} : vector<8x4096xf32> to vector<8x128xf32>
    %40 = vector.extract_strided_slice %10 {offsets = [0, 3712], sizes = [8, 128], strides = [1, 1]} : vector<8x4096xf32> to vector<8x128xf32>
    %41 = vector.extract_strided_slice %10 {offsets = [0, 3840], sizes = [8, 128], strides = [1, 1]} : vector<8x4096xf32> to vector<8x128xf32>
    %42 = vector.extract_strided_slice %10 {offsets = [0, 3968], sizes = [8, 128], strides = [1, 1]} : vector<8x4096xf32> to vector<8x128xf32>
    %43 = arith.addf %11, %12 : vector<8x128xf32>
    %44 = arith.addf %13, %14 : vector<8x128xf32>
    %45 = arith.addf %15, %16 : vector<8x128xf32>
    %46 = arith.addf %17, %18 : vector<8x128xf32>
    %47 = arith.addf %19, %20 : vector<8x128xf32>
    %48 = arith.addf %21, %22 : vector<8x128xf32>
    %49 = arith.addf %23, %24 : vector<8x128xf32>
    %50 = arith.addf %25, %26 : vector<8x128xf32>
    %51 = arith.addf %27, %28 : vector<8x128xf32>
    %52 = arith.addf %29, %30 : vector<8x128xf32>
    %53 = arith.addf %31, %32 : vector<8x128xf32>
    %54 = arith.addf %33, %34 : vector<8x128xf32>
    %55 = arith.addf %35, %36 : vector<8x128xf32>
    %56 = arith.addf %37, %38 : vector<8x128xf32>
    %57 = arith.addf %39, %40 : vector<8x128xf32>
    %58 = arith.addf %41, %42 : vector<8x128xf32>
    %59 = arith.addf %43, %44 : vector<8x128xf32>
    %60 = arith.addf %45, %46 : vector<8x128xf32>
    %61 = arith.addf %47, %48 : vector<8x128xf32>
    %62 = arith.addf %49, %50 : vector<8x128xf32>
    %63 = arith.addf %51, %52 : vector<8x128xf32>
    %64 = arith.addf %53, %54 : vector<8x128xf32>
    %65 = arith.addf %55, %56 : vector<8x128xf32>
    %66 = arith.addf %57, %58 : vector<8x128xf32>
    %67 = arith.addf %59, %60 : vector<8x128xf32>
    %68 = arith.addf %61, %62 : vector<8x128xf32>
    %69 = arith.addf %63, %64 : vector<8x128xf32>
    %70 = arith.addf %65, %66 : vector<8x128xf32>
    %71 = arith.addf %67, %68 : vector<8x128xf32>
    %72 = arith.addf %69, %70 : vector<8x128xf32>
    %73 = arith.addf %71, %72 : vector<8x128xf32>
    %c0_8 = arith.constant 0 : index
    %c0_9 = arith.constant 0 : index
    %74 = vector.load %arg5[%c0_8, %c0_9] : memref<1x128xf32, #tpu.memory_space<vmem>>, vector<1x128xf32>
    %75 = vector.broadcast %74 : vector<1x128xf32> to vector<8x128xf32>
    %76 = arith.addf %73, %75 : vector<8x128xf32>
    %cst_10 = arith.constant 0.000000e+00 : f32
    %77 = vector.broadcast %cst_10 : f32 to vector<8x128xf32>
    %78 = arith.subf %77, %76 : vector<8x128xf32>
    %79 = math.exp %78 : vector<8x128xf32>
    %cst_11 = arith.constant 1.000000e+00 : f32
    %80 = vector.broadcast %cst_11 : f32 to vector<8x128xf32>
    %81 = arith.addf %80, %79 : vector<8x128xf32>
    %cst_12 = arith.constant 1.000000e+00 : f32
    %82 = vector.broadcast %cst_12 : f32 to vector<8x128xf32>
    %83 = arith.divf %82, %81 : vector<8x128xf32>
    %c0_13 = arith.constant 0 : index
    %c0_14 = arith.constant 0 : index
    %84 = vector.load %arg6[%c0_13, %c0_14] : memref<8x128xf32, #tpu.memory_space<vmem>>, vector<8x128xf32>
    tpu.vector_store %arg6[%c0_13, %c0_14], %83 {strides = array<i32>} : memref<8x128xf32, #tpu.memory_space<vmem>>, vector<8x128xf32>,
    return
  }
  func.func @transform_0(%arg0: i32) -> (i32, i32) {
    %c0_i32 = arith.constant 0 : i32
    %c0_i32_0 = arith.constant 0 : i32
    return %arg0, %c0_i32 : i32, i32
  }
  func.func @transform_1(%arg0: i32) -> (i32, i32) {
    %c0_i32 = arith.constant 0 : i32
    %c0_i32_0 = arith.constant 0 : i32
    %c0_i32_1 = arith.constant 0 : i32
    return %c0_i32, %c0_i32_0 : i32, i32
  }
  func.func @transform_2(%arg0: i32) -> (i32, i32) {
    %c0_i32 = arith.constant 0 : i32
    %c0_i32_0 = arith.constant 0 : i32
    %c0_i32_1 = arith.constant 0 : i32
    return %c0_i32, %c0_i32_0 : i32, i32
  }
  func.func @transform_3(%arg0: i32) -> (i32, i32) {
    %c0_i32 = arith.constant 0 : i32
    %c0_i32_0 = arith.constant 0 : i32
    %c0_i32_1 = arith.constant 0 : i32
    return %c0_i32, %c0_i32_0 : i32, i32
  }
  func.func @transform_4(%arg0: i32) -> (i32, i32) {
    %c0_i32 = arith.constant 0 : i32
    %c0_i32_0 = arith.constant 0 : i32
    %c0_i32_1 = arith.constant 0 : i32
    return %c0_i32, %c0_i32_0 : i32, i32
  }
  func.func @transform_5(%arg0: i32) -> (i32, i32) {
    %c0_i32 = arith.constant 0 : i32
    %c0_i32_0 = arith.constant 0 : i32
    return %arg0, %c0_i32 : i32, i32
  }
}

</mosaic_0001>

<llo_original>
// kernel: tpu_custom_call.1
$region0: #{tpu_custom_call.1}
  #allocation0 [shape = 'u32[]', space=smem, size = 0x4, offset = 0x4, fixed_abs, tag = 'smem constant byte address 0x4 - core index']
  #allocation1 [shape = 'u32[144,128]{1,0:T(1,128)}', space=vmem, size = 0x12000, scoped, tag = 'internal scratch']
  %s0 = inlined_call_operand.hbm [shape: f32[8,64], index: 0, kind: input, shape index: {}]
  %s1 = inlined_call_operand.hbm [shape: f32[64,4096], index: 1, kind: input, shape index: {}]
  %s2 = inlined_call_operand.hbm [shape: f32[1,4096], index: 2, kind: input, shape index: {}]
  %s3 = inlined_call_operand.hbm [shape: f32[1,4096], index: 3, kind: input, shape index: {}]
  %s4 = inlined_call_operand.vmem [shape: f32[1,128], index: 4, kind: input, shape index: {}]
  %s5 = inlined_call_operand.hbm [shape: f32[8,128], index: 5, kind: output, shape index: {}]
  %s6 = sld [smem:[#allocation0]]
  $region46: #{tpu_custom_call.1} parent=0
    _
  %s8 = ssub.s32 1, %s6
  %s9 = scalar_select 0, %s8, %s6
  $region1: #{tpu_custom_call.1} parent=0
    #allocation2 [shape = 'u8[4096]{0}', space=vmem, size = 0x1000, scoped, tag = 'input window, operand 0, single buffered']
    #allocation3 [shape = 's32[1]{0}', space=sflag, size = 0x4, scoped, tag = 'scoped memory for tpu_custom_call.1']
    #allocation4 [shape = 's32[1]{0}', space=sflag, size = 0x4, scoped, tag = 'scoped memory for tpu_custom_call.1']
    #allocation5 [shape = 'u8[1048576]{0}', space=vmem, size = 0x100000, scoped, tag = 'input window, operand 1, single buffered']
    #allocation6 [shape = 's32[1]{0}', space=sflag, size = 0x4, scoped, tag = 'scoped memory for tpu_custom_call.1']
    #allocation7 [shape = 'u8[16384]{0}', space=vmem, size = 0x4000, scoped, tag = 'input window, operand 2, single buffered']
    #allocation8 [shape = 'u8[16384]{0}', space=vmem, size = 0x4000, scoped, tag = 'input window, operand 3, single buffered']
    #allocation9 [shape = 's32[1]{0}', space=sflag, size = 0x4, scoped, tag = 'scoped memory for tpu_custom_call.1']
    #allocation10 [shape = 'u8[4096]{0}', space=vmem, size = 0x1000, scoped, tag = 'output window, operand 0, single buffered']
    %10 = vsyncpa [#allocation3], 0
    %11 = vsyncpa [#allocation6], 0
    %12 = vsyncpa [#allocation9], 0
    %13 = vsyncpa [#allocation4], 0
    // Predicated region
    $region2: #{tpu_custom_call.1} parent=1 // pred_check
      _
    $region3: #{tpu_custom_call.1} parent=1 // pred_check_branch
      %15 = sbr.rel (0) target = $region5
    $region4: #{tpu_custom_call.1} parent=1 // pred_region
      %s17 = ssub.s32 128, 128
      %18 = vsyncadd [#allocation3], %s17
      %s20 = sshll.u32 [#allocation2], 4
      %s21 = int_to_ptr.vmem [resolvable:$true] %s20
      %23 = dma.hbm_to_vmem [thread:$0]  %s0, 128, %s21, [#allocation3]
    $region5: #{tpu_custom_call.1} parent=1 // pred_fallthru
      _
    // Predicated region
    $region6: #{tpu_custom_call.1} parent=1 // pred_check
      _
    $region7: #{tpu_custom_call.1} parent=1 // pred_check_branch
      %25 = sbr.rel (0) target = $region9
    $region8: #{tpu_custom_call.1} parent=1 // pred_region
      %s27 = ssub.s32 32768, 32768
      %28 = vsyncadd [#allocation6], %s27
      %s29 = sshll.u32 [#allocation5], 4
      %s30 = int_to_ptr.vmem [resolvable:$true] %s29
      %35 = dma.hbm_to_vmem [thread:$0]  %s1, 32768, %s30, [#allocation6], 4096, 4096, 256
    $region9: #{tpu_custom_call.1} parent=1 // pred_fallthru
      _
    // Predicated region
    $region10: #{tpu_custom_call.1} parent=1 // pred_check
      _
    $region11: #{tpu_custom_call.1} parent=1 // pred_check_branch
      %37 = sbr.rel (0) target = $region13
    $region12: #{tpu_custom_call.1} parent=1 // pred_region
      %s39 = ssub.s32 512, 512
      %40 = vsyncadd [#allocation6], %s39
      %s42 = sshll.u32 [#allocation7], 4
      %s43 = int_to_ptr.vmem [resolvable:$true] %s42
      %45 = dma.hbm_to_vmem [thread:$0]  %s2, 512, %s43, [#allocation6]
    $region13: #{tpu_custom_call.1} parent=1 // pred_fallthru
      _
    // Predicated region
    $region14: #{tpu_custom_call.1} parent=1 // pred_check
      _
    $region15: #{tpu_custom_call.1} parent=1 // pred_check_branch
      %47 = sbr.rel (0) target = $region17
    $region16: #{tpu_custom_call.1} parent=1 // pred_region
      %s49 = ssub.s32 512, 512
      %50 = vsyncadd [#allocation9], %s49
      %s52 = sshll.u32 [#allocation8], 4
      %s53 = int_to_ptr.vmem [resolvable:$true] %s52
      %55 = dma.hbm_to_vmem [thread:$0]  %s3, 512, %s53, [#allocation9]
    $region17: #{tpu_custom_call.1} parent=1 // pred_fallthru
      _
    // Predicated region
    $region18: #{tpu_custom_call.1} parent=1 // pred_check
      _
    $region19: #{tpu_custom_call.1} parent=1 // pred_check_branch
      %57 = sbr.rel (0) target = $region21
    $region20: #{tpu_custom_call.1} parent=1 // pred_region
      _
    $region21: #{tpu_custom_call.1} parent=1 // pred_fallthru
      _
    // Predicated region
    $region22: #{tpu_custom_call.1} parent=1 // pred_check
      _
    $region23: #{tpu_custom_call.1} parent=1 // pred_check_branch
      %59 = sbr.rel (0) target = $region25
    $region24: #{tpu_custom_call.1} parent=1 // pred_region
      %60 = dma.done [#allocation3], 128
    $region25: #{tpu_custom_call.1} parent=1 // pred_fallthru
      _
    // Predicated region
    $region26: #{tpu_custom_call.1} parent=1 // pred_check
      _
    $region27: #{tpu_custom_call.1} parent=1 // pred_check_branch
      %62 = sbr.rel (0) target = $region29
    $region28: #{tpu_custom_call.1} parent=1 // pred_region
      %63 = dma.done [#allocation6], 32768
    $region29: #{tpu_custom_call.1} parent=1 // pred_fallthru
      _
    // Predicated region
    $region30: #{tpu_custom_call.1} parent=1 // pred_check
      _
    $region31: #{tpu_custom_call.1} parent=1 // pred_check_branch
      %65 = sbr.rel (0) target = $region33
    $region32: #{tpu_custom_call.1} parent=1 // pred_region
      %66 = dma.done [#allocation6], 512
    $region33: #{tpu_custom_call.1} parent=1 // pred_fallthru
      _
    // Predicated region
    $region34: #{tpu_custom_call.1} parent=1 // pred_check
      _
    $region35: #{tpu_custom_call.1} parent=1 // pred_check_branch
      %68 = sbr.rel (0) target = $region37
    $region36: #{tpu_custom_call.1} parent=1 // pred_region
      %69 = dma.done [#allocation9], 512
    $region37: #{tpu_custom_call.1} parent=1 // pred_fallthru
      _
    %v70 = vld [vmem:[#allocation2] sm:$0xff]
    %v71 = vld [vmem:[#allocation5] sm:$0xff]
    %v72 = vld [vmem:[#allocation5 + $0x8] sm:$0xff]
    %v73 = vld [vmem:[#allocation5 + $0x10] sm:$0xff]
    %v74 = vld [vmem:[#allocation5 + $0x18] sm:$0xff]
    %v75 = vld [vmem:[#allocation5 + $0x20] sm:$0xff]
    %v76 = vld [vmem:[#allocation5 + $0x28] sm:$0xff]
    %v77 = vld [vmem:[#allocation5 + $0x30] sm:$0xff]
    %v78 = vld [vmem:[#allocation5 + $0x38] sm:$0xff]
    %v79 = vld [vmem:[#allocation5 + $0x40] sm:$0xff]
    %v80 = vld [vmem:[#allocation5 + $0x48] sm:$0xff]
    %v81 = vld [vmem:[#allocation5 + $0x50] sm:$0xff]
    %v82 = vld [vmem:[#allocation5 + $0x58] sm:$0xff]
    %v83 = vld [vmem:[#allocation5 + $0x60] sm:$0xff]
    %v84 = vld [vmem:[#allocation5 + $0x68] sm:$0xff]
    %v85 = vld [vmem:[#allocation5 + $0x70] sm:$0xff]
    %v86 = vld [vmem:[#allocation5 + $0x78] sm:$0xff]
    %v87 = vld [vmem:[#allocation5 + $0x80] sm:$0xff]
    %v88 = vld [vmem:[#allocation5 + $0x88] sm:$0xff]
    %v89 = vld [vmem:[#allocation5 + $0x90] sm:$0xff]
    %v90 = vld [vmem:[#allocation5 + $0x98] sm:$0xff]
    %v91 = vld [vmem:[#allocation5 + $0xa0] sm:$0xff]
    %v92 = vld [vmem:[#allocation5 + $0xa8] sm:$0xff]
    %v93 = vld [vmem:[#allocation5 + $0xb0] sm:$0xff]
    %v94 = vld [vmem:[#allocation5 + $0xb8] sm:$0xff]
    %v95 = vld [vmem:[#allocation5 + $0xc0] sm:$0xff]
    %v96 = vld [vmem:[#allocation5 + $0xc8] sm:$0xff]
    %v97 = vld [vmem:[#allocation5 + $0xd0] sm:$0xff]
    %v98 = vld [vmem:[#allocation5 + $0xd8] sm:$0xff]
    %v99 = vld [vmem:[#allocation5 + $0xe0] sm:$0xff]
    %v100 = vld [vmem:[#allocation5 + $0xe8] sm:$0xff]
    %v101 = vld [vmem:[#allocation5 + $0xf0] sm:$0xff]
    %v102 = vld [vmem:[#allocation5 + $0xf8] sm:$0xff]
    %v103 = vld [vmem:[#allocation5 + $0x100] sm:$0xff]
    %v104 = vld [vmem:[#allocation5 + $0x108] sm:$0xff]
    %v105 = vld [vmem:[#allocation5 + $0x110] sm:$0xff]
    %v106 = vld [vmem:[#allocation5 + $0x118] sm:$0xff]
    %v107 = vld [vmem:[#allocation5 + $0x120] sm:$0xff]
    %v108 = vld [vmem:[#allocation5 + $0x128] sm:$0xff]
    %v109 = vld [vmem:[#allocation5 + $0x130] sm:$0xff]
    %v110 = vld [vmem:[#allocation5 + $0x138] sm:$0xff]
    %v111 = vld [vmem:[#allocation5 + $0x140] sm:$0xff]
    %v112 = vld [vmem:[#allocation5 + $0x148] sm:$0xff]
    %v113 = vld [vmem:[#allocation5 + $0x150] sm:$0xff]
    %v114 = vld [vmem:[#allocation5 + $0x158] sm:$0xff]
    %v115 = vld [vmem:[#allocation5 + $0x160] sm:$0xff]
    %v116 = vld [vmem:[#allocation5 + $0x168] sm:$0xff]
    %v117 = vld [vmem:[#allocation5 + $0x170] sm:$0xff]
    %v118 = vld [vmem:[#allocation5 + $0x178] sm:$0xff]
    %v119 = vld [vmem:[#allocation5 + $0x180] sm:$0xff]
    %v120 = vld [vmem:[#allocation5 + $0x188] sm:$0xff]
    %v121 = vld [vmem:[#allocation5 + $0x190] sm:$0xff]
    %v122 = vld [vmem:[#allocation5 + $0x198] sm:$0xff]
    %v123 = vld [vmem:[#allocation5 + $0x1a0] sm:$0xff]
    %v124 = vld [vmem:[#allocation5 + $0x1a8] sm:$0xff]
    %v125 = vld [vmem:[#allocation5 + $0x1b0] sm:$0xff]
    %v126 = vld [vmem:[#allocation5 + $0x1b8] sm:$0xff]
    %v127 = vld [vmem:[#allocation5 + $0x1c0] sm:$0xff]
    %v128 = vld [vmem:[#allocation5 + $0x1c8] sm:$0xff]
    %v129 = vld [vmem:[#allocation5 + $0x1d0] sm:$0xff]
    %v130 = vld [vmem:[#allocation5 + $0x1d8] sm:$0xff]
    %v131 = vld [vmem:[#allocation5 + $0x1e0] sm:$0xff]
    %v132 = vld [vmem:[#allocation5 + $0x1e8] sm:$0xff]
    %v133 = vld [vmem:[#allocation5 + $0x1f0] sm:$0xff]
    %v134 = vld [vmem:[#allocation5 + $0x1f8] sm:$0xff]
    %v135 = vld [vmem:[#allocation5 + $0x200] sm:$0xff]
    %v136 = vld [vmem:[#allocation5 + $0x208] sm:$0xff]
    %v137 = vld [vmem:[#allocation5 + $0x210] sm:$0xff]
    %v138 = vld [vmem:[#allocation5 + $0x218] sm:$0xff]
    %v139 = vld [vmem:[#allocation5 + $0x220] sm:$0xff]
    %v140 = vld [vmem:[#allocation5 + $0x228] sm:$0xff]
    %v141 = vld [vmem:[#allocation5 + $0x230] sm:$0xff]
    %v142 = vld [vmem:[#allocation5 + $0x238] sm:$0xff]
    %v143 = vld [vmem:[#allocation5 + $0x240] sm:$0xff]
    %v144 = vld [vmem:[#allocation5 + $0x248] sm:$0xff]
    %v145 = vld [vmem:[#allocation5 + $0x250] sm:$0xff]
    %v146 = vld [vmem:[#allocation5 + $0x258] sm:$0xff]
    %v147 = vld [vmem:[#allocation5 + $0x260] sm:$0xff]
    %v148 = vld [vmem:[#allocation5 + $0x268] sm:$0xff]
    %v149 = vld [vmem:[#allocation5 + $0x270] sm:$0xff]
    %v150 = vld [vmem:[#allocation5 + $0x278] sm:$0xff]
    %v151 = vld [vmem:[#allocation5 + $0x280] sm:$0xff]
    %v152 = vld [vmem:[#allocation5 + $0x288] sm:$0xff]
    %v153 = vld [vmem:[#allocation5 + $0x290] sm:$0xff]
    %v154 = vld [vmem:[#allocation5 + $0x298] sm:$0xff]
    %v155 = vld [vmem:[#allocation5 + $0x2a0] sm:$0xff]
    %v156 = vld [vmem:[#allocation5 + $0x2a8] sm:$0xff]
    %v157 = vld [vmem:[#allocation5 + $0x2b0] sm:$0xff]
    %v158 = vld [vmem:[#allocation5 + $0x2b8] sm:$0xff]
    %v159 = vld [vmem:[#allocation5 + $0x2c0] sm:$0xff]
    %v160 = vld [vmem:[#allocation5 + $0x2c8] sm:$0xff]
    %v161 = vld [vmem:[#allocation5 + $0x2d0] sm:$0xff]
    %v162 = vld [vmem:[#allocation5 + $0x2d8] sm:$0xff]
    %v163 = vld [vmem:[#allocation5 + $0x2e0] sm:$0xff]
    %v164 = vld [vmem:[#allocation5 + $0x2e8] sm:$0xff]
    %v165 = vld [vmem:[#allocation5 + $0x2f0] sm:$0xff]
    %v166 = vld [vmem:[#allocation5 + $0x2f8] sm:$0xff]
    %v167 = vld [vmem:[#allocation5 + $0x300] sm:$0xff]
    %v168 = vld [vmem:[#allocation5 + $0x308] sm:$0xff]
    %v169 = vld [vmem:[#allocation5 + $0x310] sm:$0xff]
    %v170 = vld [vmem:[#allocation5 + $0x318] sm:$0xff]
    %v171 = vld [vmem:[#allocation5 + $0x320] sm:$0xff]
    %v172 = vld [vmem:[#allocation5 + $0x328] sm:$0xff]
    %v173 = vld [vmem:[#allocation5 + $0x330] sm:$0xff]
    %v174 = vld [vmem:[#allocation5 + $0x338] sm:$0xff]
    %v175 = vld [vmem:[#allocation5 + $0x340] sm:$0xff]
    %v176 = vld [vmem:[#allocation5 + $0x348] sm:$0xff]
    %v177 = vld [vmem:[#allocation5 + $0x350] sm:$0xff]
    %v178 = vld [vmem:[#allocation5 + $0x358] sm:$0xff]
    %v179 = vld [vmem:[#allocation5 + $0x360] sm:$0xff]
    %v180 = vld [vmem:[#allocation5 + $0x368] sm:$0xff]
    %v181 = vld [vmem:[#allocation5 + $0x370] sm:$0xff]
    %v182 = vld [vmem:[#allocation5 + $0x378] sm:$0xff]
    %v183 = vld [vmem:[#allocation5 + $0x380] sm:$0xff]
    %v184 = vld [vmem:[#allocation5 + $0x388] sm:$0xff]
    %v185 = vld [vmem:[#allocation5 + $0x390] sm:$0xff]
    %v186 = vld [vmem:[#allocation5 + $0x398] sm:$0xff]
    %v187 = vld [vmem:[#allocation5 + $0x3a0] sm:$0xff]
    %v188 = vld [vmem:[#allocation5 + $0x3a8] sm:$0xff]
    %v189 = vld [vmem:[#allocation5 + $0x3b0] sm:$0xff]
    %v190 = vld [vmem:[#allocation5 + $0x3b8] sm:$0xff]
    %v191 = vld [vmem:[#allocation5 + $0x3c0] sm:$0xff]
    %v192 = vld [vmem:[#allocation5 + $0x3c8] sm:$0xff]
    %v193 = vld [vmem:[#allocation5 + $0x3d0] sm:$0xff]
    %v194 = vld [vmem:[#allocation5 + $0x3d8] sm:$0xff]
    %v195 = vld [vmem:[#allocation5 + $0x3e0] sm:$0xff]
    %v196 = vld [vmem:[#allocation5 + $0x3e8] sm:$0xff]
    %v197 = vld [vmem:[#allocation5 + $0x3f0] sm:$0xff]
    %v198 = vld [vmem:[#allocation5 + $0x3f8] sm:$0xff]
    %v199 = vld [vmem:[#allocation5 + $0x400] sm:$0xff]
    %v200 = vld [vmem:[#allocation5 + $0x408] sm:$0xff]
    %v201 = vld [vmem:[#allocation5 + $0x410] sm:$0xff]
    %v202 = vld [vmem:[#allocation5 + $0x418] sm:$0xff]
    %v203 = vld [vmem:[#allocation5 + $0x420] sm:$0xff]
    %v204 = vld [vmem:[#allocation5 + $0x428] sm:$0xff]
    %v205 = vld [vmem:[#allocation5 + $0x430] sm:$0xff]
    %v206 = vld [vmem:[#allocation5 + $0x438] sm:$0xff]
    %v207 = vld [vmem:[#allocation5 + $0x440] sm:$0xff]
    %v208 = vld [vmem:[#allocation5 + $0x448] sm:$0xff]
    %v209 = vld [vmem:[#allocation5 + $0x450] sm:$0xff]
    %v210 = vld [vmem:[#allocation5 + $0x458] sm:$0xff]
    %v211 = vld [vmem:[#allocation5 + $0x460] sm:$0xff]
    %v212 = vld [vmem:[#allocation5 + $0x468] sm:$0xff]
    %v213 = vld [vmem:[#allocation5 + $0x470] sm:$0xff]
    %v214 = vld [vmem:[#allocation5 + $0x478] sm:$0xff]
    %v215 = vld [vmem:[#allocation5 + $0x480] sm:$0xff]
    %v216 = vld [vmem:[#allocation5 + $0x488] sm:$0xff]
    %v217 = vld [vmem:[#allocation5 + $0x490] sm:$0xff]
    %v218 = vld [vmem:[#allocation5 + $0x498] sm:$0xff]
    %v219 = vld [vmem:[#allocation5 + $0x4a0] sm:$0xff]
    %v220 = vld [vmem:[#allocation5 + $0x4a8] sm:$0xff]
    %v221 = vld [vmem:[#allocation5 + $0x4b0] sm:$0xff]
    %v222 = vld [vmem:[#allocation5 + $0x4b8] sm:$0xff]
    %v223 = vld [vmem:[#allocation5 + $0x4c0] sm:$0xff]
    %v224 = vld [vmem:[#allocation5 + $0x4c8] sm:$0xff]
    %v225 = vld [vmem:[#allocation5 + $0x4d0] sm:$0xff]
    %v226 = vld [vmem:[#allocation5 + $0x4d8] sm:$0xff]
    %v227 = vld [vmem:[#allocation5 + $0x4e0] sm:$0xff]
    %v228 = vld [vmem:[#allocation5 + $0x4e8] sm:$0xff]
    %v229 = vld [vmem:[#allocation5 + $0x4f0] sm:$0xff]
    %v230 = vld [vmem:[#allocation5 + $0x4f8] sm:$0xff]
    %v231 = vld [vmem:[#allocation5 + $0x500] sm:$0xff]
    %v232 = vld [vmem:[#allocation5 + $0x508] sm:$0xff]
    %v233 = vld [vmem:[#allocation5 + $0x510] sm:$0xff]
    %v234 = vld [vmem:[#allocation5 + $0x518] sm:$0xff]
    %v235 = vld [vmem:[#allocation5 + $0x520] sm:$0xff]
    %v236 = vld [vmem:[#allocation5 + $0x528] sm:$0xff]
    %v237 = vld [vmem:[#allocation5 + $0x530] sm:$0xff]
    %v238 = vld [vmem:[#allocation5 + $0x538] sm:$0xff]
    %v239 = vld [vmem:[#allocation5 + $0x540] sm:$0xff]
    %v240 = vld [vmem:[#allocation5 + $0x548] sm:$0xff]
    %v241 = vld [vmem:[#allocation5 + $0x550] sm:$0xff]
    %v242 = vld [vmem:[#allocation5 + $0x558] sm:$0xff]
    %v243 = vld [vmem:[#allocation5 + $0x560] sm:$0xff]
    %v244 = vld [vmem:[#allocation5 + $0x568] sm:$0xff]
    %v245 = vld [vmem:[#allocation5 + $0x570] sm:$0xff]
    %v246 = vld [vmem:[#allocation5 + $0x578] sm:$0xff]
    %v247 = vld [vmem:[#allocation5 + $0x580] sm:$0xff]
    %v248 = vld [vmem:[#allocation5 + $0x588] sm:$0xff]
    %v249 = vld [vmem:[#allocation5 + $0x590] sm:$0xff]
    %v250 = vld [vmem:[#allocation5 + $0x598] sm:$0xff]
    %v251 = vld [vmem:[#allocation5 + $0x5a0] sm:$0xff]
    %v252 = vld [vmem:[#allocation5 + $0x5a8] sm:$0xff]
    %v253 = vld [vmem:[#allocation5 + $0x5b0] sm:$0xff]
    %v254 = vld [vmem:[#allocation5 + $0x5b8] sm:$0xff]
    %v255 = vld [vmem:[#allocation5 + $0x5c0] sm:$0xff]
    %v256 = vld [vmem:[#allocation5 + $0x5c8] sm:$0xff]
    %v257 = vld [vmem:[#allocation5 + $0x5d0] sm:$0xff]
    %v258 = vld [vmem:[#allocation5 + $0x5d8] sm:$0xff]
    %v259 = vld [vmem:[#allocation5 + $0x5e0] sm:$0xff]
    %v260 = vld [vmem:[#allocation5 + $0x5e8] sm:$0xff]
    %v261 = vld [vmem:[#allocation5 + $0x5f0] sm:$0xff]
    %v262 = vld [vmem:[#allocation5 + $0x5f8] sm:$0xff]
    %v263 = vld [vmem:[#allocation5 + $0x600] sm:$0xff]
    %v264 = vld [vmem:[#allocation5 + $0x608] sm:$0xff]
    %v265 = vld [vmem:[#allocation5 + $0x610] sm:$0xff]
    %v266 = vld [vmem:[#allocation5 + $0x618] sm:$0xff]
    %v267 = vld [vmem:[#allocation5 + $0x620] sm:$0xff]
    %v268 = vld [vmem:[#allocation5 + $0x628] sm:$0xff]
    %v269 = vld [vmem:[#allocation5 + $0x630] sm:$0xff]
    %v270 = vld [vmem:[#allocation5 + $0x638] sm:$0xff]
    %v271 = vld [vmem:[#allocation5 + $0x640] sm:$0xff]
    %v272 = vld [vmem:[#allocation5 + $0x648] sm:$0xff]
    %v273 = vld [vmem:[#allocation5 + $0x650] sm:$0xff]
    %v274 = vld [vmem:[#allocation5 + $0x658] sm:$0xff]
    %v275 = vld [vmem:[#allocation5 + $0x660] sm:$0xff]
    %v276 = vld [vmem:[#allocation5 + $0x668] sm:$0xff]
    %v277 = vld [vmem:[#allocation5 + $0x670] sm:$0xff]
    %v278 = vld [vmem:[#allocation5 + $0x678] sm:$0xff]
    %v279 = vld [vmem:[#allocation5 + $0x680] sm:$0xff]
    %v280 = vld [vmem:[#allocation5 + $0x688] sm:$0xff]
    %v281 = vld [vmem:[#allocation5 + $0x690] sm:$0xff]
    %v282 = vld [vmem:[#allocation5 + $0x698] sm:$0xff]
    %v283 = vld [vmem:[#allocation5 + $0x6a0] sm:$0xff]
    %v284 = vld [vmem:[#allocation5 + $0x6a8] sm:$0xff]
    %v285 = vld [vmem:[#allocation5 + $0x6b0] sm:$0xff]
    %v286 = vld [vmem:[#allocation5 + $0x6b8] sm:$0xff]
    %v287 = vld [vmem:[#allocation5 + $0x6c0] sm:$0xff]
    %v288 = vld [vmem:[#allocation5 + $0x6c8] sm:$0xff]
    %v289 = vld [vmem:[#allocation5 + $0x6d0] sm:$0xff]
    %v290 = vld [vmem:[#allocation5 + $0x6d8] sm:$0xff]
    %v291 = vld [vmem:[#allocation5 + $0x6e0] sm:$0xff]
    %v292 = vld [vmem:[#allocation5 + $0x6e8] sm:$0xff]
    %v293 = vld [vmem:[#allocation5 + $0x6f0] sm:$0xff]
    %v294 = vld [vmem:[#allocation5 + $0x6f8] sm:$0xff]
    %v295 = vld [vmem:[#allocation5 + $0x700] sm:$0xff]
    %v296 = vld [vmem:[#allocation5 + $0x708] sm:$0xff]
    %v297 = vld [vmem:[#allocation5 + $0x710] sm:$0xff]
    %v298 = vld [vmem:[#allocation5 + $0x718] sm:$0xff]
    %v299 = vld [vmem:[#allocation5 + $0x720] sm:$0xff]
    %v300 = vld [vmem:[#allocation5 + $0x728] sm:$0xff]
    %v301 = vld [vmem:[#allocation5 + $0x730] sm:$0xff]
    %v302 = vld [vmem:[#allocation5 + $0x738] sm:$0xff]
    %v303 = vld [vmem:[#allocation5 + $0x740] sm:$0xff]
    %v304 = vld [vmem:[#allocation5 + $0x748] sm:$0xff]
    %v305 = vld [vmem:[#allocation5 + $0x750] sm:$0xff]
    %v306 = vld [vmem:[#allocation5 + $0x758] sm:$0xff]
    %v307 = vld [vmem:[#allocation5 + $0x760] sm:$0xff]
    %v308 = vld [vmem:[#allocation5 + $0x768] sm:$0xff]
    %v309 = vld [vmem:[#allocation5 + $0x770] sm:$0xff]
    %v310 = vld [vmem:[#allocation5 + $0x778] sm:$0xff]
    %v311 = vld [vmem:[#allocation5 + $0x780] sm:$0xff]
    %v312 = vld [vmem:[#allocation5 + $0x788] sm:$0xff]
    %v313 = vld [vmem:[#allocation5 + $0x790] sm:$0xff]
    %v314 = vld [vmem:[#allocation5 + $0x798] sm:$0xff]
    %v315 = vld [vmem:[#allocation5 + $0x7a0] sm:$0xff]
    %v316 = vld [vmem:[#allocation5 + $0x7a8] sm:$0xff]
    %v317 = vld [vmem:[#allocation5 + $0x7b0] sm:$0xff]
    %v318 = vld [vmem:[#allocation5 + $0x7b8] sm:$0xff]
    %v319 = vld [vmem:[#allocation5 + $0x7c0] sm:$0xff]
    %v320 = vld [vmem:[#allocation5 + $0x7c8] sm:$0xff]
    %v321 = vld [vmem:[#allocation5 + $0x7d0] sm:$0xff]
    %v322 = vld [vmem:[#allocation5 + $0x7d8] sm:$0xff]
    %v323 = vld [vmem:[#allocation5 + $0x7e0] sm:$0xff]
    %v324 = vld [vmem:[#allocation5 + $0x7e8] sm:$0xff]
    %v325 = vld [vmem:[#allocation5 + $0x7f0] sm:$0xff]
    %v326 = vld [vmem:[#allocation5 + $0x7f8] sm:$0xff]
    %v327 = vld [vmem:[#allocation7] sm:$0xff]
    %v328 = vld [vmem:[#allocation7 + $0x8] sm:$0xff]
    %v329 = vld [vmem:[#allocation7 + $0x10] sm:$0xff]
    %v330 = vld [vmem:[#allocation7 + $0x18] sm:$0xff]
    %v335 = vlaneseq
    %v336 = vshrl.u32 %v335, 7
    %v337 = vsub.s32 0, %v336
    %v338 = vrot.slane %v327, %v337
    %v339 = vlaneseq
    %v340 = vshrl.u32 %v339, 7
    %v341 = vsub.s32 1, %v340
    %v342 = vrot.slane %v327, %v341
    %v343 = vlaneseq
    %v344 = vshrl.u32 %v343, 7
    %v345 = vsub.s32 2, %v344
    %v346 = vrot.slane %v327, %v345
    %v347 = vlaneseq
    %v348 = vshrl.u32 %v347, 7
    %v349 = vsub.s32 3, %v348
    %v350 = vrot.slane %v327, %v349
    %v351 = vlaneseq
    %v352 = vshrl.u32 %v351, 7
    %v353 = vsub.s32 4, %v352
    %v354 = vrot.slane %v327, %v353
    %v355 = vlaneseq
    %v356 = vshrl.u32 %v355, 7
    %v357 = vsub.s32 5, %v356
    %v358 = vrot.slane %v327, %v357
    %v359 = vlaneseq
    %v360 = vshrl.u32 %v359, 7
    %v361 = vsub.s32 6, %v360
    %v362 = vrot.slane %v327, %v361
    %v363 = vlaneseq
    %v364 = vshrl.u32 %v363, 7
    %v365 = vsub.s32 7, %v364
    %v366 = vrot.slane %v327, %v365
    %v367 = vlaneseq
    %v368 = vshrl.u32 %v367, 7
    %v369 = vsub.s32 0, %v368
    %v370 = vrot.slane %v328, %v369
    %v371 = vlaneseq
    %v372 = vshrl.u32 %v371, 7
    %v373 = vsub.s32 1, %v372
    %v374 = vrot.slane %v328, %v373
    %v375 = vlaneseq
    %v376 = vshrl.u32 %v375, 7
    %v377 = vsub.s32 2, %v376
    %v378 = vrot.slane %v328, %v377
    %v379 = vlaneseq
    %v380 = vshrl.u32 %v379, 7
    %v381 = vsub.s32 3, %v380
    %v382 = vrot.slane %v328, %v381
    %v383 = vlaneseq
    %v384 = vshrl.u32 %v383, 7
    %v385 = vsub.s32 4, %v384
    %v386 = vrot.slane %v328, %v385
    %v387 = vlaneseq
    %v388 = vshrl.u32 %v387, 7
    %v389 = vsub.s32 5, %v388
    %v390 = vrot.slane %v328, %v389
    %v391 = vlaneseq
    %v392 = vshrl.u32 %v391, 7
    %v393 = vsub.s32 6, %v392
    %v394 = vrot.slane %v328, %v393
    %v395 = vlaneseq
    %v396 = vshrl.u32 %v395, 7
    %v397 = vsub.s32 7, %v396
    %v398 = vrot.slane %v328, %v397
    %v399 = vlaneseq
    %v400 = vshrl.u32 %v399, 7
    %v401 = vsub.s32 0, %v400
    %v402 = vrot.slane %v329, %v401
    %v403 = vlaneseq
    %v404 = vshrl.u32 %v403, 7
    %v405 = vsub.s32 1, %v404
    %v406 = vrot.slane %v329, %v405
    %v407 = vlaneseq
    %v408 = vshrl.u32 %v407, 7
    %v409 = vsub.s32 2, %v408
    %v410 = vrot.slane %v329, %v409
    %v411 = vlaneseq
    %v412 = vshrl.u32 %v411, 7
    %v413 = vsub.s32 3, %v412
    %v414 = vrot.slane %v329, %v413
    %v415 = vlaneseq
    %v416 = vshrl.u32 %v415, 7
    %v417 = vsub.s32 4, %v416
    %v418 = vrot.slane %v329, %v417
    %v419 = vlaneseq
    %v420 = vshrl.u32 %v419, 7
    %v421 = vsub.s32 5, %v420
    %v422 = vrot.slane %v329, %v421
    %v423 = vlaneseq
    %v424 = vshrl.u32 %v423, 7
    %v425 = vsub.s32 6, %v424
    %v426 = vrot.slane %v329, %v425
    %v427 = vlaneseq
    %v428 = vshrl.u32 %v427, 7
    %v429 = vsub.s32 7, %v428
    %v430 = vrot.slane %v329, %v429
    %v431 = vlaneseq
    %v432 = vshrl.u32 %v431, 7
    %v433 = vsub.s32 0, %v432
    %v434 = vrot.slane %v330, %v433
    %v435 = vlaneseq
    %v436 = vshrl.u32 %v435, 7
    %v437 = vsub.s32 1, %v436
    %v438 = vrot.slane %v330, %v437
    %v439 = vlaneseq
    %v440 = vshrl.u32 %v439, 7
    %v441 = vsub.s32 2, %v440
    %v442 = vrot.slane %v330, %v441
    %v443 = vlaneseq
    %v444 = vshrl.u32 %v443, 7
    %v445 = vsub.s32 3, %v444
    %v446 = vrot.slane %v330, %v445
    %v447 = vlaneseq
    %v448 = vshrl.u32 %v447, 7
    %v449 = vsub.s32 4, %v448
    %v450 = vrot.slane %v330, %v449
    %v451 = vlaneseq
    %v452 = vshrl.u32 %v451, 7
    %v453 = vsub.s32 5, %v452
    %v454 = vrot.slane %v330, %v453
    %v455 = vlaneseq
    %v456 = vshrl.u32 %v455, 7
    %v457 = vsub.s32 6, %v456
    %v458 = vrot.slane %v330, %v457
    %v459 = vlaneseq
    %v460 = vshrl.u32 %v459, 7
    %v461 = vsub.s32 7, %v460
    %v462 = vrot.slane %v330, %v461
    %vm495 = vcmask 523264
    %v497 = vsel %vm495, %v70, 0
    %499 = vmatprep.subr.mxu0 %v72
    %500 = vmatpush1.msra.mxu0 %v71
    %501 = vmatprep.subr.mxu0 %v104
    %502 = vmatpush1.msra.mxu0 %v103
    %503 = vmatprep.subr.mxu0 %v136
    %504 = vmatpush1.msra.mxu0 %v135
    %505 = vmatprep.subr.mxu0 %v168
    %506 = vmatpush1.msra.mxu0 %v167
    %507 = vmatprep.subr.mxu0 %v200
    %508 = vmatpush1.msra.mxu0 %v199
    %509 = vmatprep.subr.mxu0 %v232
    %510 = vmatpush1.msra.mxu0 %v231
    %511 = vmatprep.subr.mxu0 %v264
    %512 = vmatpush1.msra.mxu0 %v263
    %513 = vmatprep.subr.mxu0 %v296
    %514 = vmatpush1.msra.mxu0 %v295
    %515 = vmatprep.subr.mxu0 0.0
    %516 = vmatpush1.msra.mxu0 0.0
    %517 = vmatprep.subr.mxu0 0.0
    %518 = vmatpush1.msra.mxu0 0.0
    %519 = vmatprep.subr.mxu0 0.0
    %520 = vmatpush1.msra.mxu0 0.0
    %521 = vmatprep.subr.mxu0 0.0
    %522 = vmatpush1.msra.mxu0 0.0
    %523 = vmatprep.subr.mxu0 0.0
    %524 = vmatpush1.msra.mxu0 0.0
    %525 = vmatprep.subr.mxu0 0.0
    %526 = vmatpush1.msra.mxu0 0.0
    %527 = vmatprep.subr.mxu0 0.0
    %528 = vmatpush1.msra.mxu0 0.0
    %529 = vmatprep.subr.mxu0 0.0
    %530 = vmatpush1.msra.mxu0 0.0
    %531 = vmatprep.subr.mxu0 0.0
    %532 = vmatpush1.msra.mxu0 0.0
    %533 = vmatprep.subr.mxu0 0.0
    %534 = vmatpush1.msra.mxu0 0.0
    %535 = vmatprep.subr.mxu0 0.0
    %536 = vmatpush1.msra.mxu0 0.0
    %537 = vmatprep.subr.mxu0 0.0
    %538 = vmatpush1.msra.mxu0 0.0
    %539 = vmatprep.subr.mxu0 0.0
    %540 = vmatpush1.msra.mxu0 0.0
    %541 = vmatprep.subr.mxu0 0.0
    %542 = vmatpush1.msra.mxu0 0.0
    %543 = vmatprep.subr.mxu0 0.0
    %544 = vmatpush1.msra.mxu0 0.0
    %545 = vmatprep.subr.mxu0 0.0
    %546 = vmatpush1.msra.mxu0 0.0
    %547 = vmatprep.subr.mxu0 0.0
    %548 = vmatpush1.msra.mxu0 0.0
    %549 = vmatprep.subr.mxu0 0.0
    %550 = vmatpush1.msra.mxu0 0.0
    %551 = vmatprep.subr.mxu0 0.0
    %552 = vmatpush1.msra.mxu0 0.0
    %553 = vmatprep.subr.mxu0 0.0
    %554 = vmatpush1.msra.mxu0 0.0
    %555 = vmatprep.subr.mxu0 0.0
    %556 = vmatpush1.msra.mxu0 0.0
    %557 = vmatprep.subr.mxu0 0.0
    %558 = vmatpush1.msra.mxu0 0.0
    %559 = vmatprep.subr.mxu0 0.0
    %560 = vmatpush1.msra.mxu0 0.0
    %561 = vmatprep.subr.mxu0 0.0
    %562 = vmatpush1.msra.mxu0 0.0
    %563 = vmatprep.mubr.f32.mxu0 0.0
    %564 = vmatmul.mubr.f32.gmra.mrb[0].mxu0 %v497
    %v565 = vpop.f32.mrb[0].mxu0
    %v566 = vadd.f32 %v338, %v565
    %v567 = vpop.f32.mrb[0].mxu0
    %v568 = vadd.f32 %v342, %v567
    %569 = vdwg.mxu0
    %570 = vmatprep.subr.mxu0 %v74
    %571 = vmatpush1.msra.mxu0 %v73
    %572 = vmatprep.subr.mxu0 %v106
    %573 = vmatpush1.msra.mxu0 %v105
    %574 = vmatprep.subr.mxu0 %v138
    %575 = vmatpush1.msra.mxu0 %v137
    %576 = vmatprep.subr.mxu0 %v170
    %577 = vmatpush1.msra.mxu0 %v169
    %578 = vmatprep.subr.mxu0 %v202
    %579 = vmatpush1.msra.mxu0 %v201
    %580 = vmatprep.subr.mxu0 %v234
    %581 = vmatpush1.msra.mxu0 %v233
    %582 = vmatprep.subr.mxu0 %v266
    %583 = vmatpush1.msra.mxu0 %v265
    %584 = vmatprep.subr.mxu0 %v298
    %585 = vmatpush1.msra.mxu0 %v297
    %586 = vmatprep.subr.mxu0 0.0
    %587 = vmatpush1.msra.mxu0 0.0
    %588 = vmatprep.subr.mxu0 0.0
    %589 = vmatpush1.msra.mxu0 0.0
    %590 = vmatprep.subr.mxu0 0.0
    %591 = vmatpush1.msra.mxu0 0.0
    %592 = vmatprep.subr.mxu0 0.0
    %593 = vmatpush1.msra.mxu0 0.0
    %594 = vmatprep.subr.mxu0 0.0
    %595 = vmatpush1.msra.mxu0 0.0
    %596 = vmatprep.subr.mxu0 0.0
    %597 = vmatpush1.msra.mxu0 0.0
    %598 = vmatprep.subr.mxu0 0.0
    %599 = vmatpush1.msra.mxu0 0.0
    %600 = vmatprep.subr.mxu0 0.0
    %601 = vmatpush1.msra.mxu0 0.0
    %602 = vmatprep.subr.mxu0 0.0
    %603 = vmatpush1.msra.mxu0 0.0
    %604 = vmatprep.subr.mxu0 0.0
    %605 = vmatpush1.msra.mxu0 0.0
    %606 = vmatprep.subr.mxu0 0.0
    %607 = vmatpush1.msra.mxu0 0.0
    %608 = vmatprep.subr.mxu0 0.0
    %609 = vmatpush1.msra.mxu0 0.0
    %610 = vmatprep.subr.mxu0 0.0
    %611 = vmatpush1.msra.mxu0 0.0
    %612 = vmatprep.subr.mxu0 0.0
    %613 = vmatpush1.msra.mxu0 0.0
    %614 = vmatprep.subr.mxu0 0.0
    %615 = vmatpush1.msra.mxu0 0.0
    %616 = vmatprep.subr.mxu0 0.0
    %617 = vmatpush1.msra.mxu0 0.0
    %618 = vmatprep.subr.mxu0 0.0
    %619 = vmatpush1.msra.mxu0 0.0
    %620 = vmatprep.subr.mxu0 0.0
    %621 = vmatpush1.msra.mxu0 0.0
    %622 = vmatprep.subr.mxu0 0.0
    %623 = vmatpush1.msra.mxu0 0.0
    %624 = vmatprep.subr.mxu0 0.0
    %625 = vmatpush1.msra.mxu0 0.0
    %626 = vmatprep.subr.mxu0 0.0
    %627 = vmatpush1.msra.mxu0 0.0
    %628 = vmatprep.subr.mxu0 0.0
    %629 = vmatpush1.msra.mxu0 0.0
    %630 = vmatprep.subr.mxu0 0.0
    %631 = vmatpush1.msra.mxu0 0.0
    %632 = vmatprep.subr.mxu0 0.0
    %633 = vmatpush1.msra.mxu0 0.0
    %634 = vmatprep.mubr.f32.mxu0 0.0
    %635 = vmatmul.mubr.f32.gmra.mrb[0].mxu0 %v497
    %v636 = vpop.f32.mrb[0].mxu0
    %v637 = vadd.f32 %v346, %v636
    %v638 = vpop.f32.mrb[0].mxu0
    %v639 = vadd.f32 %v350, %v638
    %640 = vdwg.mxu0
    %641 = vmatprep.subr.mxu0 %v76
    %642 = vmatpush1.msra.mxu0 %v75
    %643 = vmatprep.subr.mxu0 %v108
    %644 = vmatpush1.msra.mxu0 %v107
    %645 = vmatprep.subr.mxu0 %v140
    %646 = vmatpush1.msra.mxu0 %v139
    %647 = vmatprep.subr.mxu0 %v172
    %648 = vmatpush1.msra.mxu0 %v171
    %649 = vmatprep.subr.mxu0 %v204
    %650 = vmatpush1.msra.mxu0 %v203
    %651 = vmatprep.subr.mxu0 %v236
    %652 = vmatpush1.msra.mxu0 %v235
    %653 = vmatprep.subr.mxu0 %v268
    %654 = vmatpush1.msra.mxu0 %v267
    %655 = vmatprep.subr.mxu0 %v300
    %656 = vmatpush1.msra.mxu0 %v299
    %657 = vmatprep.subr.mxu0 0.0
    %658 = vmatpush1.msra.mxu0 0.0
    %659 = vmatprep.subr.mxu0 0.0
    %660 = vmatpush1.msra.mxu0 0.0
    %661 = vmatprep.subr.mxu0 0.0
    %662 = vmatpush1.msra.mxu0 0.0
    %663 = vmatprep.subr.mxu0 0.0
    %664 = vmatpush1.msra.mxu0 0.0
    %665 = vmatprep.subr.mxu0 0.0
    %666 = vmatpush1.msra.mxu0 0.0
    %667 = vmatprep.subr.mxu0 0.0
    %668 = vmatpush1.msra.mxu0 0.0
    %669 = vmatprep.subr.mxu0 0.0
    %670 = vmatpush1.msra.mxu0 0.0
    %671 = vmatprep.subr.mxu0 0.0
    %672 = vmatpush1.msra.mxu0 0.0
    %673 = vmatprep.subr.mxu0 0.0
    %674 = vmatpush1.msra.mxu0 0.0
    %675 = vmatprep.subr.mxu0 0.0
    %676 = vmatpush1.msra.mxu0 0.0
    %677 = vmatprep.subr.mxu0 0.0
    %678 = vmatpush1.msra.mxu0 0.0
    %679 = vmatprep.subr.mxu0 0.0
    %680 = vmatpush1.msra.mxu0 0.0
    %681 = vmatprep.subr.mxu0 0.0
    %682 = vmatpush1.msra.mxu0 0.0
    %683 = vmatprep.subr.mxu0 0.0
    %684 = vmatpush1.msra.mxu0 0.0
    %685 = vmatprep.subr.mxu0 0.0
    %686 = vmatpush1.msra.mxu0 0.0
    %687 = vmatprep.subr.mxu0 0.0
    %688 = vmatpush1.msra.mxu0 0.0
    %689 = vmatprep.subr.mxu0 0.0
    %690 = vmatpush1.msra.mxu0 0.0
    %691 = vmatprep.subr.mxu0 0.0
    %692 = vmatpush1.msra.mxu0 0.0
    %693 = vmatprep.subr.mxu0 0.0
    %694 = vmatpush1.msra.mxu0 0.0
    %695 = vmatprep.subr.mxu0 0.0
    %696 = vmatpush1.msra.mxu0 0.0
    %697 = vmatprep.subr.mxu0 0.0
    %698 = vmatpush1.msra.mxu0 0.0
    %699 = vmatprep.subr.mxu0 0.0
    %700 = vmatpush1.msra.mxu0 0.0
    %701 = vmatprep.subr.mxu0 0.0
    %702 = vmatpush1.msra.mxu0 0.0
    %703 = vmatprep.subr.mxu0 0.0
    %704 = vmatpush1.msra.mxu0 0.0
    %705 = vmatprep.mubr.f32.mxu0 0.0
    %706 = vmatmul.mubr.f32.gmra.mrb[0].mxu0 %v497
    %v707 = vpop.f32.mrb[0].mxu0
    %v708 = vadd.f32 %v354, %v707
    %v709 = vpop.f32.mrb[0].mxu0
    %v710 = vadd.f32 %v358, %v709
    %711 = vdwg.mxu0
    %712 = vmatprep.subr.mxu0 %v78
    %713 = vmatpush1.msra.mxu0 %v77
    %714 = vmatprep.subr.mxu0 %v110
    %715 = vmatpush1.msra.mxu0 %v109
    %716 = vmatprep.subr.mxu0 %v142
    %717 = vmatpush1.msra.mxu0 %v141
    %718 = vmatprep.subr.mxu0 %v174
    %719 = vmatpush1.msra.mxu0 %v173
    %720 = vmatprep.subr.mxu0 %v206
    %721 = vmatpush1.msra.mxu0 %v205
    %722 = vmatprep.subr.mxu0 %v238
    %723 = vmatpush1.msra.mxu0 %v237
    %724 = vmatprep.subr.mxu0 %v270
    %725 = vmatpush1.msra.mxu0 %v269
    %726 = vmatprep.subr.mxu0 %v302
    %727 = vmatpush1.msra.mxu0 %v301
    %728 = vmatprep.subr.mxu0 0.0
    %729 = vmatpush1.msra.mxu0 0.0
    %730 = vmatprep.subr.mxu0 0.0
    %731 = vmatpush1.msra.mxu0 0.0
    %732 = vmatprep.subr.mxu0 0.0
    %733 = vmatpush1.msra.mxu0 0.0
    %734 = vmatprep.subr.mxu0 0.0
    %735 = vmatpush1.msra.mxu0 0.0
    %736 = vmatprep.subr.mxu0 0.0
    %737 = vmatpush1.msra.mxu0 0.0
    %738 = vmatprep.subr.mxu0 0.0
    %739 = vmatpush1.msra.mxu0 0.0
    %740 = vmatprep.subr.mxu0 0.0
    %741 = vmatpush1.msra.mxu0 0.0
    %742 = vmatprep.subr.mxu0 0.0
    %743 = vmatpush1.msra.mxu0 0.0
    %744 = vmatprep.subr.mxu0 0.0
    %745 = vmatpush1.msra.mxu0 0.0
    %746 = vmatprep.subr.mxu0 0.0
    %747 = vmatpush1.msra.mxu0 0.0
    %748 = vmatprep.subr.mxu0 0.0
    %749 = vmatpush1.msra.mxu0 0.0
    %750 = vmatprep.subr.mxu0 0.0
    %751 = vmatpush1.msra.mxu0 0.0
    %752 = vmatprep.subr.mxu0 0.0
    %753 = vmatpush1.msra.mxu0 0.0
    %754 = vmatprep.subr.mxu0 0.0
    %755 = vmatpush1.msra.mxu0 0.0
    %756 = vmatprep.subr.mxu0 0.0
    %757 = vmatpush1.msra.mxu0 0.0
    %758 = vmatprep.subr.mxu0 0.0
    %759 = vmatpush1.msra.mxu0 0.0
    %760 = vmatprep.subr.mxu0 0.0
    %761 = vmatpush1.msra.mxu0 0.0
    %762 = vmatprep.subr.mxu0 0.0
    %763 = vmatpush1.msra.mxu0 0.0
    %764 = vmatprep.subr.mxu0 0.0
    %765 = vmatpush1.msra.mxu0 0.0
    %766 = vmatprep.subr.mxu0 0.0
    %767 = vmatpush1.msra.mxu0 0.0
    %768 = vmatprep.subr.mxu0 0.0
    %769 = vmatpush1.msra.mxu0 0.0
    %770 = vmatprep.subr.mxu0 0.0
    %771 = vmatpush1.msra.mxu0 0.0
    %772 = vmatprep.subr.mxu0 0.0
    %773 = vmatpush1.msra.mxu0 0.0
    %774 = vmatprep.subr.mxu0 0.0
    %775 = vmatpush1.msra.mxu0 0.0
    %776 = vmatprep.mubr.f32.mxu0 0.0
    %777 = vmatmul.mubr.f32.gmra.mrb[0].mxu0 %v497
    %v778 = vpop.f32.mrb[0].mxu0
    %v779 = vadd.f32 %v362, %v778
    %v780 = vpop.f32.mrb[0].mxu0
    %v781 = vadd.f32 %v366, %v780
    %782 = vdwg.mxu0
    %783 = vmatprep.subr.mxu0 %v80
    %784 = vmatpush1.msra.mxu0 %v79
    %785 = vmatprep.subr.mxu0 %v112
    %786 = vmatpush1.msra.mxu0 %v111
    %787 = vmatprep.subr.mxu0 %v144
    %788 = vmatpush1.msra.mxu0 %v143
    %789 = vmatprep.subr.mxu0 %v176
    %790 = vmatpush1.msra.mxu0 %v175
    %791 = vmatprep.subr.mxu0 %v208
    %792 = vmatpush1.msra.mxu0 %v207
    %793 = vmatprep.subr.mxu0 %v240
    %794 = vmatpush1.msra.mxu0 %v239
    %795 = vmatprep.subr.mxu0 %v272
    %796 = vmatpush1.msra.mxu0 %v271
    %797 = vmatprep.subr.mxu0 %v304
    %798 = vmatpush1.msra.mxu0 %v303
    %799 = vmatprep.subr.mxu0 0.0
    %800 = vmatpush1.msra.mxu0 0.0
    %801 = vmatprep.subr.mxu0 0.0
    %802 = vmatpush1.msra.mxu0 0.0
    %803 = vmatprep.subr.mxu0 0.0
    %804 = vmatpush1.msra.mxu0 0.0
    %805 = vmatprep.subr.mxu0 0.0
    %806 = vmatpush1.msra.mxu0 0.0
    %807 = vmatprep.subr.mxu0 0.0
    %808 = vmatpush1.msra.mxu0 0.0
    %809 = vmatprep.subr.mxu0 0.0
    %810 = vmatpush1.msra.mxu0 0.0
    %811 = vmatprep.subr.mxu0 0.0
    %812 = vmatpush1.msra.mxu0 0.0
    %813 = vmatprep.subr.mxu0 0.0
    %814 = vmatpush1.msra.mxu0 0.0
    %815 = vmatprep.subr.mxu0 0.0
    %816 = vmatpush1.msra.mxu0 0.0
    %817 = vmatprep.subr.mxu0 0.0
    %818 = vmatpush1.msra.mxu0 0.0
    %819 = vmatprep.subr.mxu0 0.0
    %820 = vmatpush1.msra.mxu0 0.0
    %821 = vmatprep.subr.mxu0 0.0
    %822 = vmatpush1.msra.mxu0 0.0
    %823 = vmatprep.subr.mxu0 0.0
    %824 = vmatpush1.msra.mxu0 0.0
    %825 = vmatprep.subr.mxu0 0.0
    %826 = vmatpush1.msra.mxu0 0.0
    %827 = vmatprep.subr.mxu0 0.0
    %828 = vmatpush1.msra.mxu0 0.0
    %829 = vmatprep.subr.mxu0 0.0
    %830 = vmatpush1.msra.mxu0 0.0
    %831 = vmatprep.subr.mxu0 0.0
    %832 = vmatpush1.msra.mxu0 0.0
    %833 = vmatprep.subr.mxu0 0.0
    %834 = vmatpush1.msra.mxu0 0.0
    %835 = vmatprep.subr.mxu0 0.0
    %836 = vmatpush1.msra.mxu0 0.0
    %837 = vmatprep.subr.mxu0 0.0
    %838 = vmatpush1.msra.mxu0 0.0
    %839 = vmatprep.subr.mxu0 0.0
    %840 = vmatpush1.msra.mxu0 0.0
    %841 = vmatprep.subr.mxu0 0.0
    %842 = vmatpush1.msra.mxu0 0.0
    %843 = vmatprep.subr.mxu0 0.0
    %844 = vmatpush1.msra.mxu0 0.0
    %845 = vmatprep.subr.mxu0 0.0
    %846 = vmatpush1.msra.mxu0 0.0
    %847 = vmatprep.mubr.f32.mxu0 0.0
    %848 = vmatmul.mubr.f32.gmra.mrb[0].mxu0 %v497
    %v849 = vpop.f32.mrb[0].mxu0
    %v850 = vadd.f32 %v370, %v849
    %v851 = vpop.f32.mrb[0].mxu0
    %v852 = vadd.f32 %v374, %v851
    %853 = vdwg.mxu0
    %854 = vmatprep.subr.mxu0 %v82
    %855 = vmatpush1.msra.mxu0 %v81
    %856 = vmatprep.subr.mxu0 %v114
    %857 = vmatpush1.msra.mxu0 %v113
    %858 = vmatprep.subr.mxu0 %v146
    %859 = vmatpush1.msra.mxu0 %v145
    %860 = vmatprep.subr.mxu0 %v178
    %861 = vmatpush1.msra.mxu0 %v177
    %862 = vmatprep.subr.mxu0 %v210
    %863 = vmatpush1.msra.mxu0 %v209
    %864 = vmatprep.subr.mxu0 %v242
    %865 = vmatpush1.msra.mxu0 %v241
    %866 = vmatprep.subr.mxu0 %v274
    %867 = vmatpush1.msra.mxu0 %v273
    %868 = vmatprep.subr.mxu0 %v306
    %869 = vmatpush1.msra.mxu0 %v305
    %870 = vmatprep.subr.mxu0 0.0
    %871 = vmatpush1.msra.mxu0 0.0
    %872 = vmatprep.subr.mxu0 0.0
    %873 = vmatpush1.msra.mxu0 0.0
    %874 = vmatprep.subr.mxu0 0.0
    %875 = vmatpush1.msra.mxu0 0.0
    %876 = vmatprep.subr.mxu0 0.0
    %877 = vmatpush1.msra.mxu0 0.0
    %878 = vmatprep.subr.mxu0 0.0
    %879 = vmatpush1.msra.mxu0 0.0
    %880 = vmatprep.subr.mxu0 0.0
    %881 = vmatpush1.msra.mxu0 0.0
    %882 = vmatprep.subr.mxu0 0.0
    %883 = vmatpush1.msra.mxu0 0.0
    %884 = vmatprep.subr.mxu0 0.0
    %885 = vmatpush1.msra.mxu0 0.0
    %886 = vmatprep.subr.mxu0 0.0
    %887 = vmatpush1.msra.mxu0 0.0
    %888 = vmatprep.subr.mxu0 0.0
    %889 = vmatpush1.msra.mxu0 0.0
    %890 = vmatprep.subr.mxu0 0.0
    %891 = vmatpush1.msra.mxu0 0.0
    %892 = vmatprep.subr.mxu0 0.0
    %893 = vmatpush1.msra.mxu0 0.0
    %894 = vmatprep.subr.mxu0 0.0
    %895 = vmatpush1.msra.mxu0 0.0
    %896 = vmatprep.subr.mxu0 0.0
    %897 = vmatpush1.msra.mxu0 0.0
    %898 = vmatprep.subr.mxu0 0.0
    %899 = vmatpush1.msra.mxu0 0.0
    %900 = vmatprep.subr.mxu0 0.0
    %901 = vmatpush1.msra.mxu0 0.0
    %902 = vmatprep.subr.mxu0 0.0
    %903 = vmatpush1.msra.mxu0 0.0
    %904 = vmatprep.subr.mxu0 0.0
    %905 = vmatpush1.msra.mxu0 0.0
    %906 = vmatprep.subr.mxu0 0.0
    %907 = vmatpush1.msra.mxu0 0.0
    %908 = vmatprep.subr.mxu0 0.0
    %909 = vmatpush1.msra.mxu0 0.0
    %910 = vmatprep.subr.mxu0 0.0
    %911 = vmatpush1.msra.mxu0 0.0
    %912 = vmatprep.subr.mxu0 0.0
    %913 = vmatpush1.msra.mxu0 0.0
    %914 = vmatprep.subr.mxu0 0.0
    %915 = vmatpush1.msra.mxu0 0.0
    %916 = vmatprep.subr.mxu0 0.0
    %917 = vmatpush1.msra.mxu0 0.0
    %918 = vmatprep.mubr.f32.mxu0 0.0
    %919 = vmatmul.mubr.f32.gmra.mrb[0].mxu0 %v497
    %v920 = vpop.f32.mrb[0].mxu0
    %v921 = vadd.f32 %v378, %v920
    %v922 = vpop.f32.mrb[0].mxu0
    %v923 = vadd.f32 %v382, %v922
    %924 = vdwg.mxu0
    %925 = vmatprep.subr.mxu0 %v84
    %926 = vmatpush1.msra.mxu0 %v83
    %927 = vmatprep.subr.mxu0 %v116
    %928 = vmatpush1.msra.mxu0 %v115
    %929 = vmatprep.subr.mxu0 %v148
    %930 = vmatpush1.msra.mxu0 %v147
    %931 = vmatprep.subr.mxu0 %v180
    %932 = vmatpush1.msra.mxu0 %v179
    %933 = vmatprep.subr.mxu0 %v212
    %934 = vmatpush1.msra.mxu0 %v211
    %935 = vmatprep.subr.mxu0 %v244
    %936 = vmatpush1.msra.mxu0 %v243
    %937 = vmatprep.subr.mxu0 %v276
    %938 = vmatpush1.msra.mxu0 %v275
    %939 = vmatprep.subr.mxu0 %v308
    %940 = vmatpush1.msra.mxu0 %v307
    %941 = vmatprep.subr.mxu0 0.0
    %942 = vmatpush1.msra.mxu0 0.0
    %943 = vmatprep.subr.mxu0 0.0
    %944 = vmatpush1.msra.mxu0 0.0
    %945 = vmatprep.subr.mxu0 0.0
    %946 = vmatpush1.msra.mxu0 0.0
    %947 = vmatprep.subr.mxu0 0.0
    %948 = vmatpush1.msra.mxu0 0.0
    %949 = vmatprep.subr.mxu0 0.0
    %950 = vmatpush1.msra.mxu0 0.0
    %951 = vmatprep.subr.mxu0 0.0
    %952 = vmatpush1.msra.mxu0 0.0
    %953 = vmatprep.subr.mxu0 0.0
    %954 = vmatpush1.msra.mxu0 0.0
    %955 = vmatprep.subr.mxu0 0.0
    %956 = vmatpush1.msra.mxu0 0.0
    %957 = vmatprep.subr.mxu0 0.0
    %958 = vmatpush1.msra.mxu0 0.0
    %959 = vmatprep.subr.mxu0 0.0
    %960 = vmatpush1.msra.mxu0 0.0
    %961 = vmatprep.subr.mxu0 0.0
    %962 = vmatpush1.msra.mxu0 0.0
    %963 = vmatprep.subr.mxu0 0.0
    %964 = vmatpush1.msra.mxu0 0.0
    %965 = vmatprep.subr.mxu0 0.0
    %966 = vmatpush1.msra.mxu0 0.0
    %967 = vmatprep.subr.mxu0 0.0
    %968 = vmatpush1.msra.mxu0 0.0
    %969 = vmatprep.subr.mxu0 0.0
    %970 = vmatpush1.msra.mxu0 0.0
    %971 = vmatprep.subr.mxu0 0.0
    %972 = vmatpush1.msra.mxu0 0.0
    %973 = vmatprep.subr.mxu0 0.0
    %974 = vmatpush1.msra.mxu0 0.0
    %975 = vmatprep.subr.mxu0 0.0
    %976 = vmatpush1.msra.mxu0 0.0
    %977 = vmatprep.subr.mxu0 0.0
    %978 = vmatpush1.msra.mxu0 0.0
    %979 = vmatprep.subr.mxu0 0.0
    %980 = vmatpush1.msra.mxu0 0.0
    %981 = vmatprep.subr.mxu0 0.0
    %982 = vmatpush1.msra.mxu0 0.0
    %983 = vmatprep.subr.mxu0 0.0
    %984 = vmatpush1.msra.mxu0 0.0
    %985 = vmatprep.subr.mxu0 0.0
    %986 = vmatpush1.msra.mxu0 0.0
    %987 = vmatprep.subr.mxu0 0.0
    %988 = vmatpush1.msra.mxu0 0.0
    %989 = vmatprep.mubr.f32.mxu0 0.0
    %990 = vmatmul.mubr.f32.gmra.mrb[0].mxu0 %v497
    %v991 = vpop.f32.mrb[0].mxu0
    %v992 = vadd.f32 %v386, %v991
    %v993 = vpop.f32.mrb[0].mxu0
    %v994 = vadd.f32 %v390, %v993
    %995 = vdwg.mxu0
    %996 = vmatprep.subr.mxu0 %v86
    %997 = vmatpush1.msra.mxu0 %v85
    %998 = vmatprep.subr.mxu0 %v118
    %999 = vmatpush1.msra.mxu0 %v117
    %1000 = vmatprep.subr.mxu0 %v150
    %1001 = vmatpush1.msra.mxu0 %v149
    %1002 = vmatprep.subr.mxu0 %v182
    %1003 = vmatpush1.msra.mxu0 %v181
    %1004 = vmatprep.subr.mxu0 %v214
    %1005 = vmatpush1.msra.mxu0 %v213
    %1006 = vmatprep.subr.mxu0 %v246
    %1007 = vmatpush1.msra.mxu0 %v245
    %1008 = vmatprep.subr.mxu0 %v278
    %1009 = vmatpush1.msra.mxu0 %v277
    %1010 = vmatprep.subr.mxu0 %v310
    %1011 = vmatpush1.msra.mxu0 %v309
    %1012 = vmatprep.subr.mxu0 0.0
    %1013 = vmatpush1.msra.mxu0 0.0
    %1014 = vmatprep.subr.mxu0 0.0
    %1015 = vmatpush1.msra.mxu0 0.0
    %1016 = vmatprep.subr.mxu0 0.0
    %1017 = vmatpush1.msra.mxu0 0.0
    %1018 = vmatprep.subr.mxu0 0.0
    %1019 = vmatpush1.msra.mxu0 0.0
    %1020 = vmatprep.subr.mxu0 0.0
    %1021 = vmatpush1.msra.mxu0 0.0
    %1022 = vmatprep.subr.mxu0 0.0
    %1023 = vmatpush1.msra.mxu0 0.0
    %1024 = vmatprep.subr.mxu0 0.0
    %1025 = vmatpush1.msra.mxu0 0.0
    %1026 = vmatprep.subr.mxu0 0.0
    %1027 = vmatpush1.msra.mxu0 0.0
    %1028 = vmatprep.subr.mxu0 0.0
    %1029 = vmatpush1.msra.mxu0 0.0
    %1030 = vmatprep.subr.mxu0 0.0
    %1031 = vmatpush1.msra.mxu0 0.0
    %1032 = vmatprep.subr.mxu0 0.0
    %1033 = vmatpush1.msra.mxu0 0.0
    %1034 = vmatprep.subr.mxu0 0.0
    %1035 = vmatpush1.msra.mxu0 0.0
    %1036 = vmatprep.subr.mxu0 0.0
    %1037 = vmatpush1.msra.mxu0 0.0
    %1038 = vmatprep.subr.mxu0 0.0
    %1039 = vmatpush1.msra.mxu0 0.0
    %1040 = vmatprep.subr.mxu0 0.0
    %1041 = vmatpush1.msra.mxu0 0.0
    %1042 = vmatprep.subr.mxu0 0.0
    %1043 = vmatpush1.msra.mxu0 0.0
    %1044 = vmatprep.subr.mxu0 0.0
    %1045 = vmatpush1.msra.mxu0 0.0
    %1046 = vmatprep.subr.mxu0 0.0
    %1047 = vmatpush1.msra.mxu0 0.0
    %1048 = vmatprep.subr.mxu0 0.0
    %1049 = vmatpush1.msra.mxu0 0.0
    %1050 = vmatprep.subr.mxu0 0.0
    %1051 = vmatpush1.msra.mxu0 0.0
    %1052 = vmatprep.subr.mxu0 0.0
    %1053 = vmatpush1.msra.mxu0 0.0
    %1054 = vmatprep.subr.mxu0 0.0
    %1055 = vmatpush1.msra.mxu0 0.0
    %1056 = vmatprep.subr.mxu0 0.0
    %1057 = vmatpush1.msra.mxu0 0.0
    %1058 = vmatprep.subr.mxu0 0.0
    %1059 = vmatpush1.msra.mxu0 0.0
    %1060 = vmatprep.mubr.f32.mxu0 0.0
    %1061 = vmatmul.mubr.f32.gmra.mrb[0].mxu0 %v497
    %v1062 = vpop.f32.mrb[0].mxu0
    %v1063 = vadd.f32 %v394, %v1062
    %v1064 = vpop.f32.mrb[0].mxu0
    %v1065 = vadd.f32 %v398, %v1064
    %1066 = vdwg.mxu0
    %1067 = vmatprep.subr.mxu0 %v88
    %1068 = vmatpush1.msra.mxu0 %v87
    %1069 = vmatprep.subr.mxu0 %v120
    %1070 = vmatpush1.msra.mxu0 %v119
    %1071 = vmatprep.subr.mxu0 %v152
    %1072 = vmatpush1.msra.mxu0 %v151
    %1073 = vmatprep.subr.mxu0 %v184
    %1074 = vmatpush1.msra.mxu0 %v183
    %1075 = vmatprep.subr.mxu0 %v216
    %1076 = vmatpush1.msra.mxu0 %v215
    %1077 = vmatprep.subr.mxu0 %v248
    %1078 = vmatpush1.msra.mxu0 %v247
    %1079 = vmatprep.subr.mxu0 %v280
    %1080 = vmatpush1.msra.mxu0 %v279
    %1081 = vmatprep.subr.mxu0 %v312
    %1082 = vmatpush1.msra.mxu0 %v311
    %1083 = vmatprep.subr.mxu0 0.0
    %1084 = vmatpush1.msra.mxu0 0.0
    %1085 = vmatprep.subr.mxu0 0.0
    %1086 = vmatpush1.msra.mxu0 0.0
    %1087 = vmatprep.subr.mxu0 0.0
    %1088 = vmatpush1.msra.mxu0 0.0
    %1089 = vmatprep.subr.mxu0 0.0
    %1090 = vmatpush1.msra.mxu0 0.0
    %1091 = vmatprep.subr.mxu0 0.0
    %1092 = vmatpush1.msra.mxu0 0.0
    %1093 = vmatprep.subr.mxu0 0.0
    %1094 = vmatpush1.msra.mxu0 0.0
    %1095 = vmatprep.subr.mxu0 0.0
    %1096 = vmatpush1.msra.mxu0 0.0
    %1097 = vmatprep.subr.mxu0 0.0
    %1098 = vmatpush1.msra.mxu0 0.0
    %1099 = vmatprep.subr.mxu0 0.0
    %1100 = vmatpush1.msra.mxu0 0.0
    %1101 = vmatprep.subr.mxu0 0.0
    %1102 = vmatpush1.msra.mxu0 0.0
    %1103 = vmatprep.subr.mxu0 0.0
    %1104 = vmatpush1.msra.mxu0 0.0
    %1105 = vmatprep.subr.mxu0 0.0
    %1106 = vmatpush1.msra.mxu0 0.0
    %1107 = vmatprep.subr.mxu0 0.0
    %1108 = vmatpush1.msra.mxu0 0.0
    %1109 = vmatprep.subr.mxu0 0.0
    %1110 = vmatpush1.msra.mxu0 0.0
    %1111 = vmatprep.subr.mxu0 0.0
    %1112 = vmatpush1.msra.mxu0 0.0
    %1113 = vmatprep.subr.mxu0 0.0
    %1114 = vmatpush1.msra.mxu0 0.0
    %1115 = vmatprep.subr.mxu0 0.0
    %1116 = vmatpush1.msra.mxu0 0.0
    %1117 = vmatprep.subr.mxu0 0.0
    %1118 = vmatpush1.msra.mxu0 0.0
    %1119 = vmatprep.subr.mxu0 0.0
    %1120 = vmatpush1.msra.mxu0 0.0
    %1121 = vmatprep.subr.mxu0 0.0
    %1122 = vmatpush1.msra.mxu0 0.0
    %1123 = vmatprep.subr.mxu0 0.0
    %1124 = vmatpush1.msra.mxu0 0.0
    %1125 = vmatprep.subr.mxu0 0.0
    %1126 = vmatpush1.msra.mxu0 0.0
    %1127 = vmatprep.subr.mxu0 0.0
    %1128 = vmatpush1.msra.mxu0 0.0
    %1129 = vmatprep.subr.mxu0 0.0
    %1130 = vmatpush1.msra.mxu0 0.0
    %1131 = vmatprep.mubr.f32.mxu0 0.0
    %1132 = vmatmul.mubr.f32.gmra.mrb[0].mxu0 %v497
    %v1133 = vpop.f32.mrb[0].mxu0
    %v1134 = vadd.f32 %v402, %v1133
    %v1135 = vpop.f32.mrb[0].mxu0
    %v1136 = vadd.f32 %v406, %v1135
    %1137 = vdwg.mxu0
    %1138 = vmatprep.subr.mxu0 %v90
    %1139 = vmatpush1.msra.mxu0 %v89
    %1140 = vmatprep.subr.mxu0 %v122
    %1141 = vmatpush1.msra.mxu0 %v121
    %1142 = vmatprep.subr.mxu0 %v154
    %1143 = vmatpush1.msra.mxu0 %v153
    %1144 = vmatprep.subr.mxu0 %v186
    %1145 = vmatpush1.msra.mxu0 %v185
    %1146 = vmatprep.subr.mxu0 %v218
    %1147 = vmatpush1.msra.mxu0 %v217
    %1148 = vmatprep.subr.mxu0 %v250
    %1149 = vmatpush1.msra.mxu0 %v249
    %1150 = vmatprep.subr.mxu0 %v282
    %1151 = vmatpush1.msra.mxu0 %v281
    %1152 = vmatprep.subr.mxu0 %v314
    %1153 = vmatpush1.msra.mxu0 %v313
    %1154 = vmatprep.subr.mxu0 0.0
    %1155 = vmatpush1.msra.mxu0 0.0
    %1156 = vmatprep.subr.mxu0 0.0
    %1157 = vmatpush1.msra.mxu0 0.0
    %1158 = vmatprep.subr.mxu0 0.0
    %1159 = vmatpush1.msra.mxu0 0.0
    %1160 = vmatprep.subr.mxu0 0.0
    %1161 = vmatpush1.msra.mxu0 0.0
    %1162 = vmatprep.subr.mxu0 0.0
    %1163 = vmatpush1.msra.mxu0 0.0
    %1164 = vmatprep.subr.mxu0 0.0
    %1165 = vmatpush1.msra.mxu0 0.0
    %1166 = vmatprep.subr.mxu0 0.0
    %1167 = vmatpush1.msra.mxu0 0.0
    %1168 = vmatprep.subr.mxu0 0.0
    %1169 = vmatpush1.msra.mxu0 0.0
    %1170 = vmatprep.subr.mxu0 0.0
    %1171 = vmatpush1.msra.mxu0 0.0
    %1172 = vmatprep.subr.mxu0 0.0
    %1173 = vmatpush1.msra.mxu0 0.0
    %1174 = vmatprep.subr.mxu0 0.0
    %1175 = vmatpush1.msra.mxu0 0.0
    %1176 = vmatprep.subr.mxu0 0.0
    %1177 = vmatpush1.msra.mxu0 0.0
    %1178 = vmatprep.subr.mxu0 0.0
    %1179 = vmatpush1.msra.mxu0 0.0
    %1180 = vmatprep.subr.mxu0 0.0
    %1181 = vmatpush1.msra.mxu0 0.0
    %1182 = vmatprep.subr.mxu0 0.0
    %1183 = vmatpush1.msra.mxu0 0.0
    %1184 = vmatprep.subr.mxu0 0.0
    %1185 = vmatpush1.msra.mxu0 0.0
    %1186 = vmatprep.subr.mxu0 0.0
    %1187 = vmatpush1.msra.mxu0 0.0
    %1188 = vmatprep.subr.mxu0 0.0
    %1189 = vmatpush1.msra.mxu0 0.0
    %1190 = vmatprep.subr.mxu0 0.0
    %1191 = vmatpush1.msra.mxu0 0.0
    %1192 = vmatprep.subr.mxu0 0.0
    %1193 = vmatpush1.msra.mxu0 0.0
    %1194 = vmatprep.subr.mxu0 0.0
    %1195 = vmatpush1.msra.mxu0 0.0
    %1196 = vmatprep.subr.mxu0 0.0
    %1197 = vmatpush1.msra.mxu0 0.0
    %1198 = vmatprep.subr.mxu0 0.0
    %1199 = vmatpush1.msra.mxu0 0.0
    %1200 = vmatprep.subr.mxu0 0.0
    %1201 = vmatpush1.msra.mxu0 0.0
    %1202 = vmatprep.mubr.f32.mxu0 0.0
    %1203 = vmatmul.mubr.f32.gmra.mrb[0].mxu0 %v497
    %v1204 = vpop.f32.mrb[0].mxu0
    %v1205 = vadd.f32 %v410, %v1204
    %v1206 = vpop.f32.mrb[0].mxu0
    %v1207 = vadd.f32 %v414, %v1206
    %1208 = vdwg.mxu0
    %1209 = vmatprep.subr.mxu0 %v92
    %1210 = vmatpush1.msra.mxu0 %v91
    %1211 = vmatprep.subr.mxu0 %v124
    %1212 = vmatpush1.msra.mxu0 %v123
    %1213 = vmatprep.subr.mxu0 %v156
    %1214 = vmatpush1.msra.mxu0 %v155
    %1215 = vmatprep.subr.mxu0 %v188
    %1216 = vmatpush1.msra.mxu0 %v187
    %1217 = vmatprep.subr.mxu0 %v220
    %1218 = vmatpush1.msra.mxu0 %v219
    %1219 = vmatprep.subr.mxu0 %v252
    %1220 = vmatpush1.msra.mxu0 %v251
    %1221 = vmatprep.subr.mxu0 %v284
    %1222 = vmatpush1.msra.mxu0 %v283
    %1223 = vmatprep.subr.mxu0 %v316
    %1224 = vmatpush1.msra.mxu0 %v315
    %1225 = vmatprep.subr.mxu0 0.0
    %1226 = vmatpush1.msra.mxu0 0.0
    %1227 = vmatprep.subr.mxu0 0.0
    %1228 = vmatpush1.msra.mxu0 0.0
    %1229 = vmatprep.subr.mxu0 0.0
    %1230 = vmatpush1.msra.mxu0 0.0
    %1231 = vmatprep.subr.mxu0 0.0
    %1232 = vmatpush1.msra.mxu0 0.0
    %1233 = vmatprep.subr.mxu0 0.0
    %1234 = vmatpush1.msra.mxu0 0.0
    %1235 = vmatprep.subr.mxu0 0.0
    %1236 = vmatpush1.msra.mxu0 0.0
    %1237 = vmatprep.subr.mxu0 0.0
    %1238 = vmatpush1.msra.mxu0 0.0
    %1239 = vmatprep.subr.mxu0 0.0
    %1240 = vmatpush1.msra.mxu0 0.0
    %1241 = vmatprep.subr.mxu0 0.0
    %1242 = vmatpush1.msra.mxu0 0.0
    %1243 = vmatprep.subr.mxu0 0.0
    %1244 = vmatpush1.msra.mxu0 0.0
    %1245 = vmatprep.subr.mxu0 0.0
    %1246 = vmatpush1.msra.mxu0 0.0
    %1247 = vmatprep.subr.mxu0 0.0
    %1248 = vmatpush1.msra.mxu0 0.0
    %1249 = vmatprep.subr.mxu0 0.0
    %1250 = vmatpush1.msra.mxu0 0.0
    %1251 = vmatprep.subr.mxu0 0.0
    %1252 = vmatpush1.msra.mxu0 0.0
    %1253 = vmatprep.subr.mxu0 0.0
    %1254 = vmatpush1.msra.mxu0 0.0
    %1255 = vmatprep.subr.mxu0 0.0
    %1256 = vmatpush1.msra.mxu0 0.0
    %1257 = vmatprep.subr.mxu0 0.0
    %1258 = vmatpush1.msra.mxu0 0.0
    %1259 = vmatprep.subr.mxu0 0.0
    %1260 = vmatpush1.msra.mxu0 0.0
    %1261 = vmatprep.subr.mxu0 0.0
    %1262 = vmatpush1.msra.mxu0 0.0
    %1263 = vmatprep.subr.mxu0 0.0
    %1264 = vmatpush1.msra.mxu0 0.0
    %1265 = vmatprep.subr.mxu0 0.0
    %1266 = vmatpush1.msra.mxu0 0.0
    %1267 = vmatprep.subr.mxu0 0.0
    %1268 = vmatpush1.msra.mxu0 0.0
    %1269 = vmatprep.subr.mxu0 0.0
    %1270 = vmatpush1.msra.mxu0 0.0
    %1271 = vmatprep.subr.mxu0 0.0
    %1272 = vmatpush1.msra.mxu0 0.0
    %1273 = vmatprep.mubr.f32.mxu0 0.0
    %1274 = vmatmul.mubr.f32.gmra.mrb[0].mxu0 %v497
    %v1275 = vpop.f32.mrb[0].mxu0
    %v1276 = vadd.f32 %v418, %v1275
    %v1277 = vpop.f32.mrb[0].mxu0
    %v1278 = vadd.f32 %v422, %v1277
    %1279 = vdwg.mxu0
    %1280 = vmatprep.subr.mxu0 %v94
    %1281 = vmatpush1.msra.mxu0 %v93
    %1282 = vmatprep.subr.mxu0 %v126
    %1283 = vmatpush1.msra.mxu0 %v125
    %1284 = vmatprep.subr.mxu0 %v158
    %1285 = vmatpush1.msra.mxu0 %v157
    %1286 = vmatprep.subr.mxu0 %v190
    %1287 = vmatpush1.msra.mxu0 %v189
    %1288 = vmatprep.subr.mxu0 %v222
    %1289 = vmatpush1.msra.mxu0 %v221
    %1290 = vmatprep.subr.mxu0 %v254
    %1291 = vmatpush1.msra.mxu0 %v253
    %1292 = vmatprep.subr.mxu0 %v286
    %1293 = vmatpush1.msra.mxu0 %v285
    %1294 = vmatprep.subr.mxu0 %v318
    %1295 = vmatpush1.msra.mxu0 %v317
    %1296 = vmatprep.subr.mxu0 0.0
    %1297 = vmatpush1.msra.mxu0 0.0
    %1298 = vmatprep.subr.mxu0 0.0
    %1299 = vmatpush1.msra.mxu0 0.0
    %1300 = vmatprep.subr.mxu0 0.0
    %1301 = vmatpush1.msra.mxu0 0.0
    %1302 = vmatprep.subr.mxu0 0.0
    %1303 = vmatpush1.msra.mxu0 0.0
    %1304 = vmatprep.subr.mxu0 0.0
    %1305 = vmatpush1.msra.mxu0 0.0
    %1306 = vmatprep.subr.mxu0 0.0
    %1307 = vmatpush1.msra.mxu0 0.0
    %1308 = vmatprep.subr.mxu0 0.0
    %1309 = vmatpush1.msra.mxu0 0.0
    %1310 = vmatprep.subr.mxu0 0.0
    %1311 = vmatpush1.msra.mxu0 0.0
    %1312 = vmatprep.subr.mxu0 0.0
    %1313 = vmatpush1.msra.mxu0 0.0
    %1314 = vmatprep.subr.mxu0 0.0
    %1315 = vmatpush1.msra.mxu0 0.0
    %1316 = vmatprep.subr.mxu0 0.0
    %1317 = vmatpush1.msra.mxu0 0.0
    %1318 = vmatprep.subr.mxu0 0.0
    %1319 = vmatpush1.msra.mxu0 0.0
    %1320 = vmatprep.subr.mxu0 0.0
    %1321 = vmatpush1.msra.mxu0 0.0
    %1322 = vmatprep.subr.mxu0 0.0
    %1323 = vmatpush1.msra.mxu0 0.0
    %1324 = vmatprep.subr.mxu0 0.0
    %1325 = vmatpush1.msra.mxu0 0.0
    %1326 = vmatprep.subr.mxu0 0.0
    %1327 = vmatpush1.msra.mxu0 0.0
    %1328 = vmatprep.subr.mxu0 0.0
    %1329 = vmatpush1.msra.mxu0 0.0
    %1330 = vmatprep.subr.mxu0 0.0
    %1331 = vmatpush1.msra.mxu0 0.0
    %1332 = vmatprep.subr.mxu0 0.0
    %1333 = vmatpush1.msra.mxu0 0.0
    %1334 = vmatprep.subr.mxu0 0.0
    %1335 = vmatpush1.msra.mxu0 0.0
    %1336 = vmatprep.subr.mxu0 0.0
    %1337 = vmatpush1.msra.mxu0 0.0
    %1338 = vmatprep.subr.mxu0 0.0
    %1339 = vmatpush1.msra.mxu0 0.0
    %1340 = vmatprep.subr.mxu0 0.0
    %1341 = vmatpush1.msra.mxu0 0.0
    %1342 = vmatprep.subr.mxu0 0.0
    %1343 = vmatpush1.msra.mxu0 0.0
    %1344 = vmatprep.mubr.f32.mxu0 0.0
    %1345 = vmatmul.mubr.f32.gmra.mrb[0].mxu0 %v497
    %v1346 = vpop.f32.mrb[0].mxu0
    %v1347 = vadd.f32 %v426, %v1346
    %v1348 = vpop.f32.mrb[0].mxu0
    %v1349 = vadd.f32 %v430, %v1348
    %1350 = vdwg.mxu0
    %1351 = vmatprep.subr.mxu0 %v96
    %1352 = vmatpush1.msra.mxu0 %v95
    %1353 = vmatprep.subr.mxu0 %v128
    %1354 = vmatpush1.msra.mxu0 %v127
    %1355 = vmatprep.subr.mxu0 %v160
    %1356 = vmatpush1.msra.mxu0 %v159
    %1357 = vmatprep.subr.mxu0 %v192
    %1358 = vmatpush1.msra.mxu0 %v191
    %1359 = vmatprep.subr.mxu0 %v224
    %1360 = vmatpush1.msra.mxu0 %v223
    %1361 = vmatprep.subr.mxu0 %v256
    %1362 = vmatpush1.msra.mxu0 %v255
    %1363 = vmatprep.subr.mxu0 %v288
    %1364 = vmatpush1.msra.mxu0 %v287
    %1365 = vmatprep.subr.mxu0 %v320
    %1366 = vmatpush1.msra.mxu0 %v319
    %1367 = vmatprep.subr.mxu0 0.0
    %1368 = vmatpush1.msra.mxu0 0.0
    %1369 = vmatprep.subr.mxu0 0.0
    %1370 = vmatpush1.msra.mxu0 0.0
    %1371 = vmatprep.subr.mxu0 0.0
    %1372 = vmatpush1.msra.mxu0 0.0
    %1373 = vmatprep.subr.mxu0 0.0
    %1374 = vmatpush1.msra.mxu0 0.0
    %1375 = vmatprep.subr.mxu0 0.0
    %1376 = vmatpush1.msra.mxu0 0.0
    %1377 = vmatprep.subr.mxu0 0.0
    %1378 = vmatpush1.msra.mxu0 0.0
    %1379 = vmatprep.subr.mxu0 0.0
    %1380 = vmatpush1.msra.mxu0 0.0
    %1381 = vmatprep.subr.mxu0 0.0
    %1382 = vmatpush1.msra.mxu0 0.0
    %1383 = vmatprep.subr.mxu0 0.0
    %1384 = vmatpush1.msra.mxu0 0.0
    %1385 = vmatprep.subr.mxu0 0.0
    %1386 = vmatpush1.msra.mxu0 0.0
    %1387 = vmatprep.subr.mxu0 0.0
    %1388 = vmatpush1.msra.mxu0 0.0
    %1389 = vmatprep.subr.mxu0 0.0
    %1390 = vmatpush1.msra.mxu0 0.0
    %1391 = vmatprep.subr.mxu0 0.0
    %1392 = vmatpush1.msra.mxu0 0.0
    %1393 = vmatprep.subr.mxu0 0.0
    %1394 = vmatpush1.msra.mxu0 0.0
    %1395 = vmatprep.subr.mxu0 0.0
    %1396 = vmatpush1.msra.mxu0 0.0
    %1397 = vmatprep.subr.mxu0 0.0
    %1398 = vmatpush1.msra.mxu0 0.0
    %1399 = vmatprep.subr.mxu0 0.0
    %1400 = vmatpush1.msra.mxu0 0.0
    %1401 = vmatprep.subr.mxu0 0.0
    %1402 = vmatpush1.msra.mxu0 0.0
    %1403 = vmatprep.subr.mxu0 0.0
    %1404 = vmatpush1.msra.mxu0 0.0
    %1405 = vmatprep.subr.mxu0 0.0
    %1406 = vmatpush1.msra.mxu0 0.0
    %1407 = vmatprep.subr.mxu0 0.0
    %1408 = vmatpush1.msra.mxu0 0.0
    %1409 = vmatprep.subr.mxu0 0.0
    %1410 = vmatpush1.msra.mxu0 0.0
    %1411 = vmatprep.subr.mxu0 0.0
    %1412 = vmatpush1.msra.mxu0 0.0
    %1413 = vmatprep.subr.mxu0 0.0
    %1414 = vmatpush1.msra.mxu0 0.0
    %1415 = vmatprep.mubr.f32.mxu0 0.0
    %1416 = vmatmul.mubr.f32.gmra.mrb[0].mxu0 %v497
    %v1417 = vpop.f32.mrb[0].mxu0
    %v1418 = vadd.f32 %v434, %v1417
    %v1419 = vpop.f32.mrb[0].mxu0
    %v1420 = vadd.f32 %v438, %v1419
    %1421 = vdwg.mxu0
    %1422 = vmatprep.subr.mxu0 %v98
    %1423 = vmatpush1.msra.mxu0 %v97
    %1424 = vmatprep.subr.mxu0 %v130
    %1425 = vmatpush1.msra.mxu0 %v129
    %1426 = vmatprep.subr.mxu0 %v162
    %1427 = vmatpush1.msra.mxu0 %v161
    %1428 = vmatprep.subr.mxu0 %v194
    %1429 = vmatpush1.msra.mxu0 %v193
    %1430 = vmatprep.subr.mxu0 %v226
    %1431 = vmatpush1.msra.mxu0 %v225
    %1432 = vmatprep.subr.mxu0 %v258
    %1433 = vmatpush1.msra.mxu0 %v257
    %1434 = vmatprep.subr.mxu0 %v290
    %1435 = vmatpush1.msra.mxu0 %v289
    %1436 = vmatprep.subr.mxu0 %v322
    %1437 = vmatpush1.msra.mxu0 %v321
    %1438 = vmatprep.subr.mxu0 0.0
    %1439 = vmatpush1.msra.mxu0 0.0
    %1440 = vmatprep.subr.mxu0 0.0
    %1441 = vmatpush1.msra.mxu0 0.0
    %1442 = vmatprep.subr.mxu0 0.0
    %1443 = vmatpush1.msra.mxu0 0.0
    %1444 = vmatprep.subr.mxu0 0.0
    %1445 = vmatpush1.msra.mxu0 0.0
    %1446 = vmatprep.subr.mxu0 0.0
    %1447 = vmatpush1.msra.mxu0 0.0
    %1448 = vmatprep.subr.mxu0 0.0
    %1449 = vmatpush1.msra.mxu0 0.0
    %1450 = vmatprep.subr.mxu0 0.0
    %1451 = vmatpush1.msra.mxu0 0.0
    %1452 = vmatprep.subr.mxu0 0.0
    %1453 = vmatpush1.msra.mxu0 0.0
    %1454 = vmatprep.subr.mxu0 0.0
    %1455 = vmatpush1.msra.mxu0 0.0
    %1456 = vmatprep.subr.mxu0 0.0
    %1457 = vmatpush1.msra.mxu0 0.0
    %1458 = vmatprep.subr.mxu0 0.0
    %1459 = vmatpush1.msra.mxu0 0.0
    %1460 = vmatprep.subr.mxu0 0.0
    %1461 = vmatpush1.msra.mxu0 0.0
    %1462 = vmatprep.subr.mxu0 0.0
    %1463 = vmatpush1.msra.mxu0 0.0
    %1464 = vmatprep.subr.mxu0 0.0
    %1465 = vmatpush1.msra.mxu0 0.0
    %1466 = vmatprep.subr.mxu0 0.0
    %1467 = vmatpush1.msra.mxu0 0.0
    %1468 = vmatprep.subr.mxu0 0.0
    %1469 = vmatpush1.msra.mxu0 0.0
    %1470 = vmatprep.subr.mxu0 0.0
    %1471 = vmatpush1.msra.mxu0 0.0
    %1472 = vmatprep.subr.mxu0 0.0
    %1473 = vmatpush1.msra.mxu0 0.0
    %1474 = vmatprep.subr.mxu0 0.0
    %1475 = vmatpush1.msra.mxu0 0.0
    %1476 = vmatprep.subr.mxu0 0.0
    %1477 = vmatpush1.msra.mxu0 0.0
    %1478 = vmatprep.subr.mxu0 0.0
    %1479 = vmatpush1.msra.mxu0 0.0
    %1480 = vmatprep.subr.mxu0 0.0
    %1481 = vmatpush1.msra.mxu0 0.0
    %1482 = vmatprep.subr.mxu0 0.0
    %1483 = vmatpush1.msra.mxu0 0.0
    %1484 = vmatprep.subr.mxu0 0.0
    %1485 = vmatpush1.msra.mxu0 0.0
    %1486 = vmatprep.mubr.f32.mxu0 0.0
    %1487 = vmatmul.mubr.f32.gmra.mrb[0].mxu0 %v497
    %v1488 = vpop.f32.mrb[0].mxu0
    %v1489 = vadd.f32 %v442, %v1488
    %v1490 = vpop.f32.mrb[0].mxu0
    %v1491 = vadd.f32 %v446, %v1490
    %1492 = vdwg.mxu0
    %1493 = vmatprep.subr.mxu0 %v100
    %1494 = vmatpush1.msra.mxu0 %v99
    %1495 = vmatprep.subr.mxu0 %v132
    %1496 = vmatpush1.msra.mxu0 %v131
    %1497 = vmatprep.subr.mxu0 %v164
    %1498 = vmatpush1.msra.mxu0 %v163
    %1499 = vmatprep.subr.mxu0 %v196
    %1500 = vmatpush1.msra.mxu0 %v195
    %1501 = vmatprep.subr.mxu0 %v228
    %1502 = vmatpush1.msra.mxu0 %v227
    %1503 = vmatprep.subr.mxu0 %v260
    %1504 = vmatpush1.msra.mxu0 %v259
    %1505 = vmatprep.subr.mxu0 %v292
    %1506 = vmatpush1.msra.mxu0 %v291
    %1507 = vmatprep.subr.mxu0 %v324
    %1508 = vmatpush1.msra.mxu0 %v323
    %1509 = vmatprep.subr.mxu0 0.0
    %1510 = vmatpush1.msra.mxu0 0.0
    %1511 = vmatprep.subr.mxu0 0.0
    %1512 = vmatpush1.msra.mxu0 0.0
    %1513 = vmatprep.subr.mxu0 0.0
    %1514 = vmatpush1.msra.mxu0 0.0
    %1515 = vmatprep.subr.mxu0 0.0
    %1516 = vmatpush1.msra.mxu0 0.0
    %1517 = vmatprep.subr.mxu0 0.0
    %1518 = vmatpush1.msra.mxu0 0.0
    %1519 = vmatprep.subr.mxu0 0.0
    %1520 = vmatpush1.msra.mxu0 0.0
    %1521 = vmatprep.subr.mxu0 0.0
    %1522 = vmatpush1.msra.mxu0 0.0
    %1523 = vmatprep.subr.mxu0 0.0
    %1524 = vmatpush1.msra.mxu0 0.0
    %1525 = vmatprep.subr.mxu0 0.0
    %1526 = vmatpush1.msra.mxu0 0.0
    %1527 = vmatprep.subr.mxu0 0.0
    %1528 = vmatpush1.msra.mxu0 0.0
    %1529 = vmatprep.subr.mxu0 0.0
    %1530 = vmatpush1.msra.mxu0 0.0
    %1531 = vmatprep.subr.mxu0 0.0
    %1532 = vmatpush1.msra.mxu0 0.0
    %1533 = vmatprep.subr.mxu0 0.0
    %1534 = vmatpush1.msra.mxu0 0.0
    %1535 = vmatprep.subr.mxu0 0.0
    %1536 = vmatpush1.msra.mxu0 0.0
    %1537 = vmatprep.subr.mxu0 0.0
    %1538 = vmatpush1.msra.mxu0 0.0
    %1539 = vmatprep.subr.mxu0 0.0
    %1540 = vmatpush1.msra.mxu0 0.0
    %1541 = vmatprep.subr.mxu0 0.0
    %1542 = vmatpush1.msra.mxu0 0.0
    %1543 = vmatprep.subr.mxu0 0.0
    %1544 = vmatpush1.msra.mxu0 0.0
    %1545 = vmatprep.subr.mxu0 0.0
    %1546 = vmatpush1.msra.mxu0 0.0
    %1547 = vmatprep.subr.mxu0 0.0
    %1548 = vmatpush1.msra.mxu0 0.0
    %1549 = vmatprep.subr.mxu0 0.0
    %1550 = vmatpush1.msra.mxu0 0.0
    %1551 = vmatprep.subr.mxu0 0.0
    %1552 = vmatpush1.msra.mxu0 0.0
    %1553 = vmatprep.subr.mxu0 0.0
    %1554 = vmatpush1.msra.mxu0 0.0
    %1555 = vmatprep.subr.mxu0 0.0
    %1556 = vmatpush1.msra.mxu0 0.0
    %1557 = vmatprep.mubr.f32.mxu0 0.0
    %1558 = vmatmul.mubr.f32.gmra.mrb[0].mxu0 %v497
    %v1559 = vpop.f32.mrb[0].mxu0
    %v1560 = vadd.f32 %v450, %v1559
    %v1561 = vpop.f32.mrb[0].mxu0
    %v1562 = vadd.f32 %v454, %v1561
    %1563 = vdwg.mxu0
    %1564 = vmatprep.subr.mxu0 %v102
    %1565 = vmatpush1.msra.mxu0 %v101
    %1566 = vmatprep.subr.mxu0 %v134
    %1567 = vmatpush1.msra.mxu0 %v133
    %1568 = vmatprep.subr.mxu0 %v166
    %1569 = vmatpush1.msra.mxu0 %v165
    %1570 = vmatprep.subr.mxu0 %v198
    %1571 = vmatpush1.msra.mxu0 %v197
    %1572 = vmatprep.subr.mxu0 %v230
    %1573 = vmatpush1.msra.mxu0 %v229
    %1574 = vmatprep.subr.mxu0 %v262
    %1575 = vmatpush1.msra.mxu0 %v261
    %1576 = vmatprep.subr.mxu0 %v294
    %1577 = vmatpush1.msra.mxu0 %v293
    %1578 = vmatprep.subr.mxu0 %v326
    %1579 = vmatpush1.msra.mxu0 %v325
    %1580 = vmatprep.subr.mxu0 0.0
    %1581 = vmatpush1.msra.mxu0 0.0
    %1582 = vmatprep.subr.mxu0 0.0
    %1583 = vmatpush1.msra.mxu0 0.0
    %1584 = vmatprep.subr.mxu0 0.0
    %1585 = vmatpush1.msra.mxu0 0.0
    %1586 = vmatprep.subr.mxu0 0.0
    %1587 = vmatpush1.msra.mxu0 0.0
    %1588 = vmatprep.subr.mxu0 0.0
    %1589 = vmatpush1.msra.mxu0 0.0
    %1590 = vmatprep.subr.mxu0 0.0
    %1591 = vmatpush1.msra.mxu0 0.0
    %1592 = vmatprep.subr.mxu0 0.0
    %1593 = vmatpush1.msra.mxu0 0.0
    %1594 = vmatprep.subr.mxu0 0.0
    %1595 = vmatpush1.msra.mxu0 0.0
    %1596 = vmatprep.subr.mxu0 0.0
    %1597 = vmatpush1.msra.mxu0 0.0
    %1598 = vmatprep.subr.mxu0 0.0
    %1599 = vmatpush1.msra.mxu0 0.0
    %1600 = vmatprep.subr.mxu0 0.0
    %1601 = vmatpush1.msra.mxu0 0.0
    %1602 = vmatprep.subr.mxu0 0.0
    %1603 = vmatpush1.msra.mxu0 0.0
    %1604 = vmatprep.subr.mxu0 0.0
    %1605 = vmatpush1.msra.mxu0 0.0
    %1606 = vmatprep.subr.mxu0 0.0
    %1607 = vmatpush1.msra.mxu0 0.0
    %1608 = vmatprep.subr.mxu0 0.0
    %1609 = vmatpush1.msra.mxu0 0.0
    %1610 = vmatprep.subr.mxu0 0.0
    %1611 = vmatpush1.msra.mxu0 0.0
    %1612 = vmatprep.subr.mxu0 0.0
    %1613 = vmatpush1.msra.mxu0 0.0
    %1614 = vmatprep.subr.mxu0 0.0
    %1615 = vmatpush1.msra.mxu0 0.0
    %1616 = vmatprep.subr.mxu0 0.0
    %1617 = vmatpush1.msra.mxu0 0.0
    %1618 = vmatprep.subr.mxu0 0.0
    %1619 = vmatpush1.msra.mxu0 0.0
    %1620 = vmatprep.subr.mxu0 0.0
    %1621 = vmatpush1.msra.mxu0 0.0
    %1622 = vmatprep.subr.mxu0 0.0
    %1623 = vmatpush1.msra.mxu0 0.0
    %1624 = vmatprep.subr.mxu0 0.0
    %1625 = vmatpush1.msra.mxu0 0.0
    %1626 = vmatprep.subr.mxu0 0.0
    %1627 = vmatpush1.msra.mxu0 0.0
    %1628 = vmatprep.mubr.f32.mxu0 0.0
    %1629 = vmatmul.mubr.f32.gmra.mrb[0].mxu0 %v497
    %v1630 = vpop.f32.mrb[0].mxu0
    %v1631 = vadd.f32 %v458, %v1630
    %v1632 = vpop.f32.mrb[0].mxu0
    %v1633 = vadd.f32 %v462, %v1632
    %1634 = vdwg.mxu0
    %v1635 = vmax.f32 %v566, 0.0
    %v1636 = vmax.f32 %v568, 0.0
    %v1637 = vmax.f32 %v637, 0.0
    %v1638 = vmax.f32 %v639, 0.0
    %v1639 = vmax.f32 %v708, 0.0
    %v1640 = vmax.f32 %v710, 0.0
    %v1641 = vmax.f32 %v779, 0.0
    %v1642 = vmax.f32 %v781, 0.0
    %v1643 = vmax.f32 %v850, 0.0
    %v1644 = vmax.f32 %v852, 0.0
    %v1645 = vmax.f32 %v921, 0.0
    %v1646 = vmax.f32 %v923, 0.0
    %v1647 = vmax.f32 %v992, 0.0
    %v1648 = vmax.f32 %v994, 0.0
    %v1649 = vmax.f32 %v1063, 0.0
    %v1650 = vmax.f32 %v1065, 0.0
    %v1651 = vmax.f32 %v1134, 0.0
    %v1652 = vmax.f32 %v1136, 0.0
    %v1653 = vmax.f32 %v1205, 0.0
    %v1654 = vmax.f32 %v1207, 0.0
    %v1655 = vmax.f32 %v1276, 0.0
    %v1656 = vmax.f32 %v1278, 0.0
    %v1657 = vmax.f32 %v1347, 0.0
    %v1658 = vmax.f32 %v1349, 0.0
    %v1659 = vmax.f32 %v1418, 0.0
    %v1660 = vmax.f32 %v1420, 0.0
    %v1661 = vmax.f32 %v1489, 0.0
    %v1662 = vmax.f32 %v1491, 0.0
    %v1663 = vmax.f32 %v1560, 0.0
    %v1664 = vmax.f32 %v1562, 0.0
    %v1665 = vmax.f32 %v1631, 0.0
    %v1666 = vmax.f32 %v1633, 0.0
    %v1667 = vld [vmem:[#allocation8] sm:$0xff]
    %v1668 = vld [vmem:[#allocation8 + $0x8] sm:$0xff]
    %v1669 = vld [vmem:[#allocation8 + $0x10] sm:$0xff]
    %v1670 = vld [vmem:[#allocation8 + $0x18] sm:$0xff]
    %v1675 = vlaneseq
    %v1676 = vshrl.u32 %v1675, 7
    %v1677 = vsub.s32 0, %v1676
    %v1678 = vrot.slane %v1667, %v1677
    %v1679 = vlaneseq
    %v1680 = vshrl.u32 %v1679, 7
    %v1681 = vsub.s32 1, %v1680
    %v1682 = vrot.slane %v1667, %v1681
    %v1683 = vlaneseq
    %v1684 = vshrl.u32 %v1683, 7
    %v1685 = vsub.s32 2, %v1684
    %v1686 = vrot.slane %v1667, %v1685
    %v1687 = vlaneseq
    %v1688 = vshrl.u32 %v1687, 7
    %v1689 = vsub.s32 3, %v1688
    %v1690 = vrot.slane %v1667, %v1689
    %v1691 = vlaneseq
    %v1692 = vshrl.u32 %v1691, 7
    %v1693 = vsub.s32 4, %v1692
    %v1694 = vrot.slane %v1667, %v1693
    %v1695 = vlaneseq
    %v1696 = vshrl.u32 %v1695, 7
    %v1697 = vsub.s32 5, %v1696
    %v1698 = vrot.slane %v1667, %v1697
    %v1699 = vlaneseq
    %v1700 = vshrl.u32 %v1699, 7
    %v1701 = vsub.s32 6, %v1700
    %v1702 = vrot.slane %v1667, %v1701
    %v1703 = vlaneseq
    %v1704 = vshrl.u32 %v1703, 7
    %v1705 = vsub.s32 7, %v1704
    %v1706 = vrot.slane %v1667, %v1705
    %v1707 = vlaneseq
    %v1708 = vshrl.u32 %v1707, 7
    %v1709 = vsub.s32 0, %v1708
    %v1710 = vrot.slane %v1668, %v1709
    %v1711 = vlaneseq
    %v1712 = vshrl.u32 %v1711, 7
    %v1713 = vsub.s32 1, %v1712
    %v1714 = vrot.slane %v1668, %v1713
    %v1715 = vlaneseq
    %v1716 = vshrl.u32 %v1715, 7
    %v1717 = vsub.s32 2, %v1716
    %v1718 = vrot.slane %v1668, %v1717
    %v1719 = vlaneseq
    %v1720 = vshrl.u32 %v1719, 7
    %v1721 = vsub.s32 3, %v1720
    %v1722 = vrot.slane %v1668, %v1721
    %v1723 = vlaneseq
    %v1724 = vshrl.u32 %v1723, 7
    %v1725 = vsub.s32 4, %v1724
    %v1726 = vrot.slane %v1668, %v1725
    %v1727 = vlaneseq
    %v1728 = vshrl.u32 %v1727, 7
    %v1729 = vsub.s32 5, %v1728
    %v1730 = vrot.slane %v1668, %v1729
    %v1731 = vlaneseq
    %v1732 = vshrl.u32 %v1731, 7
    %v1733 = vsub.s32 6, %v1732
    %v1734 = vrot.slane %v1668, %v1733
    %v1735 = vlaneseq
    %v1736 = vshrl.u32 %v1735, 7
    %v1737 = vsub.s32 7, %v1736
    %v1738 = vrot.slane %v1668, %v1737
    %v1739 = vlaneseq
    %v1740 = vshrl.u32 %v1739, 7
    %v1741 = vsub.s32 0, %v1740
    %v1742 = vrot.slane %v1669, %v1741
    %v1743 = vlaneseq
    %v1744 = vshrl.u32 %v1743, 7
    %v1745 = vsub.s32 1, %v1744
    %v1746 = vrot.slane %v1669, %v1745
    %v1747 = vlaneseq
    %v1748 = vshrl.u32 %v1747, 7
    %v1749 = vsub.s32 2, %v1748
    %v1750 = vrot.slane %v1669, %v1749
    %v1751 = vlaneseq
    %v1752 = vshrl.u32 %v1751, 7
    %v1753 = vsub.s32 3, %v1752
    %v1754 = vrot.slane %v1669, %v1753
    %v1755 = vlaneseq
    %v1756 = vshrl.u32 %v1755, 7
    %v1757 = vsub.s32 4, %v1756
    %v1758 = vrot.slane %v1669, %v1757
    %v1759 = vlaneseq
    %v1760 = vshrl.u32 %v1759, 7
    %v1761 = vsub.s32 5, %v1760
    %v1762 = vrot.slane %v1669, %v1761
    %v1763 = vlaneseq
    %v1764 = vshrl.u32 %v1763, 7
    %v1765 = vsub.s32 6, %v1764
    %v1766 = vrot.slane %v1669, %v1765
    %v1767 = vlaneseq
    %v1768 = vshrl.u32 %v1767, 7
    %v1769 = vsub.s32 7, %v1768
    %v1770 = vrot.slane %v1669, %v1769
    %v1771 = vlaneseq
    %v1772 = vshrl.u32 %v1771, 7
    %v1773 = vsub.s32 0, %v1772
    %v1774 = vrot.slane %v1670, %v1773
    %v1775 = vlaneseq
    %v1776 = vshrl.u32 %v1775, 7
    %v1777 = vsub.s32 1, %v1776
    %v1778 = vrot.slane %v1670, %v1777
    %v1779 = vlaneseq
    %v1780 = vshrl.u32 %v1779, 7
    %v1781 = vsub.s32 2, %v1780
    %v1782 = vrot.slane %v1670, %v1781
    %v1783 = vlaneseq
    %v1784 = vshrl.u32 %v1783, 7
    %v1785 = vsub.s32 3, %v1784
    %v1786 = vrot.slane %v1670, %v1785
    %v1787 = vlaneseq
    %v1788 = vshrl.u32 %v1787, 7
    %v1789 = vsub.s32 4, %v1788
    %v1790 = vrot.slane %v1670, %v1789
    %v1791 = vlaneseq
    %v1792 = vshrl.u32 %v1791, 7
    %v1793 = vsub.s32 5, %v1792
    %v1794 = vrot.slane %v1670, %v1793
    %v1795 = vlaneseq
    %v1796 = vshrl.u32 %v1795, 7
    %v1797 = vsub.s32 6, %v1796
    %v1798 = vrot.slane %v1670, %v1797
    %v1799 = vlaneseq
    %v1800 = vshrl.u32 %v1799, 7
    %v1801 = vsub.s32 7, %v1800
    %v1802 = vrot.slane %v1670, %v1801
    %v1835 = vmul.f32 %v1635, %v1678
    %v1836 = vmul.f32 %v1636, %v1682
    %v1837 = vmul.f32 %v1637, %v1686
    %v1838 = vmul.f32 %v1638, %v1690
    %v1839 = vmul.f32 %v1639, %v1694
    %v1840 = vmul.f32 %v1640, %v1698
    %v1841 = vmul.f32 %v1641, %v1702
    %v1842 = vmul.f32 %v1642, %v1706
    %v1843 = vmul.f32 %v1643, %v1710
    %v1844 = vmul.f32 %v1644, %v1714
    %v1845 = vmul.f32 %v1645, %v1718
    %v1846 = vmul.f32 %v1646, %v1722
    %v1847 = vmul.f32 %v1647, %v1726
    %v1848 = vmul.f32 %v1648, %v1730
    %v1849 = vmul.f32 %v1649, %v1734
    %v1850 = vmul.f32 %v1650, %v1738
    %v1851 = vmul.f32 %v1651, %v1742
    %v1852 = vmul.f32 %v1652, %v1746
    %v1853 = vmul.f32 %v1653, %v1750
    %v1854 = vmul.f32 %v1654, %v1754
    %v1855 = vmul.f32 %v1655, %v1758
    %v1856 = vmul.f32 %v1656, %v1762
    %v1857 = vmul.f32 %v1657, %v1766
    %v1858 = vmul.f32 %v1658, %v1770
    %v1859 = vmul.f32 %v1659, %v1774
    %v1860 = vmul.f32 %v1660, %v1778
    %v1861 = vmul.f32 %v1661, %v1782
    %v1862 = vmul.f32 %v1662, %v1786
    %v1863 = vmul.f32 %v1663, %v1790
    %v1864 = vmul.f32 %v1664, %v1794
    %v1865 = vmul.f32 %v1665, %v1798
    %v1866 = vmul.f32 %v1666, %v1802
    %v1867 = vadd.f32 %v1835, %v1836
    %v1868 = vadd.f32 %v1837, %v1838
    %v1869 = vadd.f32 %v1839, %v1840
    %v1870 = vadd.f32 %v1841, %v1842
    %v1871 = vadd.f32 %v1843, %v1844
    %v1872 = vadd.f32 %v1845, %v1846
    %v1873 = vadd.f32 %v1847, %v1848
    %v1874 = vadd.f32 %v1849, %v1850
    %v1875 = vadd.f32 %v1851, %v1852
    %v1876 = vadd.f32 %v1853, %v1854
    %v1877 = vadd.f32 %v1855, %v1856
    %v1878 = vadd.f32 %v1857, %v1858
    %v1879 = vadd.f32 %v1859, %v1860
    %v1880 = vadd.f32 %v1861, %v1862
    %v1881 = vadd.f32 %v1863, %v1864
    %v1882 = vadd.f32 %v1865, %v1866
    %v1883 = vadd.f32 %v1867, %v1868
    %v1884 = vadd.f32 %v1869, %v1870
    %v1885 = vadd.f32 %v1871, %v1872
    %v1886 = vadd.f32 %v1873, %v1874
    %v1887 = vadd.f32 %v1875, %v1876
    %v1888 = vadd.f32 %v1877, %v1878
    %v1889 = vadd.f32 %v1879, %v1880
    %v1890 = vadd.f32 %v1881, %v1882
    %v1891 = vadd.f32 %v1883, %v1884
    %v1892 = vadd.f32 %v1885, %v1886
    %v1893 = vadd.f32 %v1887, %v1888
    %v1894 = vadd.f32 %v1889, %v1890
    %v1895 = vadd.f32 %v1891, %v1892
    %v1896 = vadd.f32 %v1893, %v1894
    %v1897 = vadd.f32 %v1895, %v1896
    %v1898 = vld [vmem:[%s4] sm:$0x1]
    %v1900 = vlaneseq
    %v1901 = vshrl.u32 %v1900, 7
    %v1902 = vsub.s32 0, %v1901
    %v1903 = vrot.slane %v1898, %v1902
    %v1905 = vadd.f32 %v1897, %v1903
    %v1906 = vsub.f32 0.0, %v1905
    %v1907 = vmul.f32 %v1906, 1.442695
    %v1908 = vpow.pop %v1907
    %v1909 = vadd.f32 %v1908, 1.0
    %v1910 = vrcp.pop %v1909
    %v1911 = vmul.f32 1.0, %v1910
    %1912 = vst [vmem:[#allocation10] sm:$0xff] %v1911
    // Predicated region
    $region38: #{tpu_custom_call.1} parent=1 // pred_check
      _
    $region39: #{tpu_custom_call.1} parent=1 // pred_check_branch
      %1914 = sbr.rel (0) target = $region41
    $region40: #{tpu_custom_call.1} parent=1 // pred_region
      %s1916 = ssub.s32 128, 128
      %1917 = vsyncadd [#allocation4], %s1916
      %s1919 = sshll.u32 [#allocation10], 4
      %s1920 = int_to_ptr.vmem [resolvable:$true] %s1919
      %1922 = dma.vmem_to_hbm [thread:$0]  %s1920, 128, %s5, [#allocation4]
    $region41: #{tpu_custom_call.1} parent=1 // pred_fallthru
      _
    // Predicated region
    $region42: #{tpu_custom_call.1} parent=1 // pred_check
      _
    $region43: #{tpu_custom_call.1} parent=1 // pred_check_branch
      %1924 = sbr.rel (0) target = $region45
    $region44: #{tpu_custom_call.1} parent=1 // pred_region
      %1925 = dma.done [#allocation4], 128
    $region45: #{tpu_custom_call.1} parent=1 // pred_fallthru
      _
    %1926 = vsyncpa [#allocation3], 1
    %1927 = vsyncpa [#allocation6], 1
    %1928 = vsyncpa [#allocation9], 1
    %1929 = vsyncpa [#allocation4], 1

</llo_original>
